<compile_context>
chip_gen: v5e
topology: v5e:2x2
jax: 0.10.0
libtpu: 0.0.40
codegen_flags: <defaults>
</compile_context>

<pallas_src>
import jax
import jax.numpy as jnp
from jax import lax
from jax.experimental import pallas as pl
from jax.experimental.pallas import tpu as pltpu

_LANE = 128


def _round_up(x, m):
    return ((x + m - 1) // m) * m


def actor_kernel(x_ref, w1_ref, b1_ref, w2_ref, b2_ref, w3_ref, b3_ref, out_ref):
    # f32 compute path gets exact MXU passes; bf16 path uses default precision.
    prec = lax.Precision.HIGHEST if x_ref.dtype == jnp.float32 else None
    # Layer 1: linear + relu (MXU matmul, f32 accumulation; bias/relu in f32).
    h1 = jnp.dot(x_ref[...], w1_ref[...],
                 preferred_element_type=jnp.float32, precision=prec)
    h1 = jnp.maximum(h1 + b1_ref[...], 0.0).astype(w2_ref.dtype)
    # Layer 2: linear + relu.
    h2 = jnp.dot(h1, w2_ref[...],
                 preferred_element_type=jnp.float32, precision=prec)
    h2 = jnp.maximum(h2 + b2_ref[...], 0.0).astype(w3_ref.dtype)
    # Layer 3: linear + tanh (tanh on the EUP, stays f32 until the final store).
    a = jnp.dot(h2, w3_ref[...],
                preferred_element_type=jnp.float32, precision=prec)
    out_ref[...] = jnp.tanh(a + b3_ref[...]).astype(out_ref.dtype)


def prepare_actor_params(w1, b1, w2, b2, w3, b3, *, compute_dtype=jnp.bfloat16):
    """One-time weight prep: cast to compute dtype + zero-pad every feature dim to a
    multiple of 128 (lane-dense). Zero padding is semantics-preserving: padded units
    have zero weights/bias, relu(0)=0, and padded outputs are sliced off."""
    state_dim, hidden_dim = w1.shape
    action_dim = w3.shape[1]
    sd_p = _round_up(state_dim, _LANE)
    hd_p = _round_up(hidden_dim, _LANE)
    ad_p = _round_up(action_dim, _LANE)

    def pad2(a, rows, cols, dtype):
        a = jnp.asarray(a, dtype)
        return jnp.pad(a, ((0, rows - a.shape[0]), (0, cols - a.shape[1])))

    return {
        "w1": pad2(w1, sd_p, hd_p, compute_dtype),
        "b1": pad2(jnp.reshape(b1, (1, -1)), 1, hd_p, jnp.float32),
        "w2": pad2(w2, hd_p, hd_p, compute_dtype),
        "b2": pad2(jnp.reshape(b2, (1, -1)), 1, hd_p, jnp.float32),
        "w3": pad2(w3, hd_p, ad_p, compute_dtype),
        "b3": pad2(jnp.reshape(b3, (1, -1)), 1, ad_p, jnp.float32),
        "dims": (state_dim, hidden_dim, action_dim, sd_p, hd_p, ad_p),
        "compute_dtype": compute_dtype,
    }


def actor_forward(state, params, *, block_b=1024, out_dtype=None,
                  single_buffer_weights=True):
    """Fused Actor forward. `params` comes from prepare_actor_params (padded/cast once)."""
    state_dim, hidden_dim, action_dim, sd_p, hd_p, ad_p = params["dims"]
    compute_dtype = params["compute_dtype"]
    B = state.shape[0]
    out_dtype = state.dtype if out_dtype is None else out_dtype

    # Batch tile: sublane-aligned (16 rows for sub-32-bit compute dtypes). Tiny batches
    # collapse to one grid step; otherwise split into >= 2 steps (v7x megacore) while
    # capping the tile at block_b rows so big batches amortize per-step overhead and
    # keep the MXU M dimension full.
    sub = 8 if jnp.dtype(compute_dtype).itemsize >= 4 else 16
    block_b = _round_up(block_b, sub)
    B_sub = _round_up(B, sub)
    if B_sub >= 2 * sub:
        tb = min(block_b, _round_up(pl.cdiv(B_sub, 2), sub))
    else:
        tb = B_sub
    B_p = _round_up(B_sub, tb)
    grid = (B_p // tb,)

    # Per-call input prep (only the state): cast + pad batch/lane dims.
    x_p = jnp.pad(jnp.asarray(state, compute_dtype),
                  ((0, B_p - B), (0, sd_p - state_dim)))

    # VMEM footprint -> vmem_limit_bytes (v5e scoped default is only 16 MiB).
    c_item = jnp.dtype(compute_dtype).itemsize
    o_item = jnp.dtype(out_dtype).itemsize
    w_bytes = (sd_p * hd_p + hd_p * hd_p + hd_p * ad_p) * c_item
    b_bytes = (2 * hd_p + ad_p) * 4
    wbuf = 1 if single_buffer_weights else 2
    needed = wbuf * (w_bytes + b_bytes) + 2 * (tb * sd_p * c_item + tb * ad_p * o_item)
    vmem_limit = max(32 << 20, min(int(1.5 * needed) + (4 << 20), 112 << 20))

    cost = pl.CostEstimate(
        flops=2 * B_p * (sd_p * hd_p + hd_p * hd_p + hd_p * ad_p),
        transcendentals=B_p * ad_p,
        bytes_accessed=B_p * sd_p * c_item + w_bytes + b_bytes + B_p * ad_p * o_item,
    )

    def call(single_buffer):
        if single_buffer:
            # Constant (0,0) block index -> fetched once; single buffer (no pipelining
            # needed) halves resident-weight VMEM.
            resident = lambda shape: pl.BlockSpec(shape, lambda i: (0, 0),
                                                  pipeline_mode=pl.Buffered(1))
        else:
            resident = lambda shape: pl.BlockSpec(shape, lambda i: (0, 0))
        return pl.pallas_call(
            actor_kernel,
            out_shape=jax.ShapeDtypeStruct((B_p, ad_p), out_dtype),
            grid_spec=pltpu.PrefetchScalarGridSpec(
                num_scalar_prefetch=0,
                grid=grid,
                in_specs=[
                    pl.BlockSpec((tb, sd_p), lambda i: (i, 0)),   # state tile
                    resident((sd_p, hd_p)),                        # W1
                    resident((1, hd_p)),                           # b1
                    resident((hd_p, hd_p)),                        # W2
                    resident((1, hd_p)),                           # b2
                    resident((hd_p, ad_p)),                        # W3
                    resident((1, ad_p)),                           # b3
                ],
                out_specs=pl.BlockSpec((tb, ad_p), lambda i: (i, 0)),
            ),
            compiler_params=pltpu.CompilerParams(
                dimension_semantics=("parallel",),
                vmem_limit_bytes=vmem_limit),
            cost_estimate=cost,
        )(x_p, params["w1"], params["b1"], params["w2"], params["b2"],
          params["w3"], params["b3"])

    if single_buffer_weights:
        try:
            out_p = call(True)
        except Exception:
            # Older jax without pipeline_mode / Buffered(1): fall back to default
            # double buffering (correctness identical, just more weight VMEM).
            out_p = call(False)
    else:
        out_p = call(False)

    # Slice off batch / lane padding.
    return out_p[:B, :action_dim]


def init_params(key, state_dim, hidden_dim, action_dim, dtype=jnp.float32):
    """Deterministic synthetic init (PyTorch-Linear-like uniform bounds)."""
    keys = jax.random.split(key, 6)

    def lin(kw, kb, fan_in, fan_out):
        bound = 1.0 / jnp.sqrt(fan_in)
        w = jax.random.uniform(kw, (fan_in, fan_out), dtype, -bound, bound)
        b = jax.random.uniform(kb, (fan_out,), dtype, -bound, bound)
        return w, b

    w1, b1 = lin(keys[0], keys[1], state_dim, hidden_dim)
    w2, b2 = lin(keys[2], keys[3], hidden_dim, hidden_dim)
    w3, b3 = lin(keys[4], keys[5], hidden_dim, action_dim)
    return w1, b1, w2, b2, w3, b3


def actor_reference(state, w1, b1, w2, b2, w3, b3):
    prec = lax.Precision.HIGHEST
    h1 = jnp.maximum(jnp.dot(state, w1, precision=prec) + b1[None, :], 0.0)
    h2 = jnp.maximum(jnp.dot(h1, w2, precision=prec) + b2[None, :], 0.0)
    return jnp.tanh(jnp.dot(h2, w3, precision=prec) + b3[None, :])


if __name__ == "__main__":
    state_dim, action_dim, hidden_dim = 16, 4, 32
    batch = 8

    key = jax.random.PRNGKey(0)
    k_state, k_params = jax.random.split(key)

    state = jax.random.normal(k_state, (batch, state_dim), dtype=jnp.float32)
    raw = init_params(k_params, state_dim, hidden_dim, action_dim)
    ref = actor_reference(state, *raw)

    # Exactness check of the padding/tiling machinery (f32 compute, HIGHEST precision).
    params_f32 = prepare_actor_params(*raw, compute_dtype=jnp.float32)
    action_f32 = jax.block_until_ready(actor_forward(state, params_f32))
    assert action_f32.shape == (batch, action_dim)
    assert jnp.allclose(action_f32, ref, atol=1e-5, rtol=1e-5), "f32 path mismatch"

    # Fast path: bf16 inputs/weights, f32 accumulation, f32 output.
    params_bf16 = prepare_actor_params(*raw, compute_dtype=jnp.bfloat16)
    action = jax.block_until_ready(actor_forward(state, params_bf16))
    assert action.shape == (batch, action_dim)
    assert jnp.allclose(action.astype(jnp.float32), ref, atol=3e-2, rtol=3e-2), \
        "bf16 path mismatch"

    # Optional bf16 output path (halves output store traffic for big batches).
    action_bf16 = jax.block_until_ready(
        actor_forward(state, params_bf16, out_dtype=jnp.bfloat16))
    assert action_bf16.shape == (batch, action_dim)
    assert action_bf16.dtype == jnp.bfloat16
    assert jnp.allclose(action_bf16.astype(jnp.float32), ref, atol=5e-2, rtol=5e-2), \
        "bf16-output path mismatch"

    print("KERNEL_OK")
</pallas_src>

<mosaic_0001>
module attributes {stable_mosaic.version = 11 : i64} {
  func.func @actor_kernel(%arg0: i32, %arg1: memref<8x128xf32, #tpu.memory_space<vmem>>, %arg2: memref<128x128xf32, #tpu.memory_space<vmem>>, %arg3: memref<1x128xf32, #tpu.memory_space<vmem>>, %arg4: memref<128x128xf32, #tpu.memory_space<vmem>>, %arg5: memref<1x128xf32, #tpu.memory_space<vmem>>, %arg6: memref<128x128xf32, #tpu.memory_space<vmem>>, %arg7: memref<1x128xf32, #tpu.memory_space<vmem>>, %arg8: memref<8x128xf32, #tpu.memory_space<vmem>>) attributes {dimension_semantics = [#tpu.dimension_semantics<parallel>], iteration_bounds = array<i64: 1>, scalar_prefetch = 0 : i64, scratch_operands = 0 : i64, tpu.core_type = #tpu.core_type<tc>, window_params = [{transform_indices = @transform_0, window_bounds = array<i64: 8, 128>}, {pipeline_mode = #tpu.pipeline_mode<synchronous>, transform_indices = @transform_1, window_bounds = array<i64: 128, 128>}, {pipeline_mode = #tpu.pipeline_mode<synchronous>, transform_indices = @transform_2, window_bounds = array<i64: 1, 128>}, {pipeline_mode = #tpu.pipeline_mode<synchronous>, transform_indices = @transform_3, window_bounds = array<i64: 128, 128>}, {pipeline_mode = #tpu.pipeline_mode<synchronous>, transform_indices = @transform_4, window_bounds = array<i64: 1, 128>}, {pipeline_mode = #tpu.pipeline_mode<synchronous>, transform_indices = @transform_5, window_bounds = array<i64: 128, 128>}, {pipeline_mode = #tpu.pipeline_mode<synchronous>, transform_indices = @transform_6, window_bounds = array<i64: 1, 128>}, {transform_indices = @transform_7, window_bounds = array<i64: 8, 128>}]} {
    %c0 = arith.constant 0 : index
    %c0_0 = arith.constant 0 : index
    %0 = vector.load %arg1[%c0, %c0_0] : memref<8x128xf32, #tpu.memory_space<vmem>>, vector<8x128xf32>
    %c0_1 = arith.constant 0 : index
    %c0_2 = arith.constant 0 : index
    %1 = vector.load %arg2[%c0_1, %c0_2] : memref<128x128xf32, #tpu.memory_space<vmem>>, vector<128x128xf32>
    %cst = arith.constant dense<0.000000e+00> : vector<8x128xf32>
    %2 = tpu.matmul %0, %1, %cst {dimension_numbers = #tpu.dot_dimension_numbers<[1], [0], [0], [1], [0, 0, 1, 1], [], []>, precision = #tpu.contract_precision<fp32>} : vector<8x128xf32>, vector<128x128xf32>, vector<8x128xf32> -> vector<8x128xf32>
    %c0_3 = arith.constant 0 : index
    %c0_4 = arith.constant 0 : index
    %3 = vector.load %arg3[%c0_3, %c0_4] : memref<1x128xf32, #tpu.memory_space<vmem>>, vector<1x128xf32>
    %4 = vector.broadcast %3 : vector<1x128xf32> to vector<8x128xf32>
    %5 = arith.addf %2, %4 : vector<8x128xf32>
    %cst_5 = arith.constant 0.000000e+00 : f32
    %6 = vector.broadcast %cst_5 : f32 to vector<8x128xf32>
    %7 = arith.maximumf %5, %6 : vector<8x128xf32>
    %c0_6 = arith.constant 0 : index
    %c0_7 = arith.constant 0 : index
    %8 = vector.load %arg4[%c0_6, %c0_7] : memref<128x128xf32, #tpu.memory_space<vmem>>, vector<128x128xf32>
    %cst_8 = arith.constant dense<0.000000e+00> : vector<8x128xf32>
    %9 = tpu.matmul %7, %8, %cst_8 {dimension_numbers = #tpu.dot_dimension_numbers<[1], [0], [0], [1], [0, 0, 1, 1], [], []>, precision = #tpu.contract_precision<fp32>} : vector<8x128xf32>, vector<128x128xf32>, vector<8x128xf32> -> vector<8x128xf32>
    %c0_9 = arith.constant 0 : index
    %c0_10 = arith.constant 0 : index
    %10 = vector.load %arg5[%c0_9, %c0_10] : memref<1x128xf32, #tpu.memory_space<vmem>>, vector<1x128xf32>
    %11 = vector.broadcast %10 : vector<1x128xf32> to vector<8x128xf32>
    %12 = arith.addf %9, %11 : vector<8x128xf32>
    %cst_11 = arith.constant 0.000000e+00 : f32
    %13 = vector.broadcast %cst_11 : f32 to vector<8x128xf32>
    %14 = arith.maximumf %12, %13 : vector<8x128xf32>
    %c0_12 = arith.constant 0 : index
    %c0_13 = arith.constant 0 : index
    %15 = vector.load %arg6[%c0_12, %c0_13] : memref<128x128xf32, #tpu.memory_space<vmem>>, vector<128x128xf32>
    %cst_14 = arith.constant dense<0.000000e+00> : vector<8x128xf32>
    %16 = tpu.matmul %14, %15, %cst_14 {dimension_numbers = #tpu.dot_dimension_numbers<[1], [0], [0], [1], [0, 0, 1, 1], [], []>, precision = #tpu.contract_precision<fp32>} : vector<8x128xf32>, vector<128x128xf32>, vector<8x128xf32> -> vector<8x128xf32>
    %c0_15 = arith.constant 0 : index
    %c0_16 = arith.constant 0 : index
    %17 = vector.load %arg7[%c0_15, %c0_16] : memref<1x128xf32, #tpu.memory_space<vmem>>, vector<1x128xf32>
    %18 = vector.broadcast %17 : vector<1x128xf32> to vector<8x128xf32>
    %19 = arith.addf %16, %18 : vector<8x128xf32>
    %20 = math.tanh %19 : vector<8x128xf32>
    %c0_17 = arith.constant 0 : index
    %c0_18 = arith.constant 0 : index
    %21 = vector.load %arg8[%c0_17, %c0_18] : memref<8x128xf32, #tpu.memory_space<vmem>>, vector<8x128xf32>
    tpu.vector_store %arg8[%c0_17, %c0_18], %20 {strides = array<i32>} : memref<8x128xf32, #tpu.memory_space<vmem>>, vector<8x128xf32>,
    return
  }
  func.func @transform_0(%arg0: i32) -> (i32, i32) {
    %c0_i32 = arith.constant 0 : i32
    %c0_i32_0 = arith.constant 0 : i32
    return %arg0, %c0_i32 : i32, i32
  }
  func.func @transform_1(%arg0: i32) -> (i32, i32) {
    %c0_i32 = arith.constant 0 : i32
    %c0_i32_0 = arith.constant 0 : i32
    %c0_i32_1 = arith.constant 0 : i32
    return %c0_i32, %c0_i32_0 : i32, i32
  }
  func.func @transform_2(%arg0: i32) -> (i32, i32) {
    %c0_i32 = arith.constant 0 : i32
    %c0_i32_0 = arith.constant 0 : i32
    %c0_i32_1 = arith.constant 0 : i32
    return %c0_i32, %c0_i32_0 : i32, i32
  }
  func.func @transform_3(%arg0: i32) -> (i32, i32) {
    %c0_i32 = arith.constant 0 : i32
    %c0_i32_0 = arith.constant 0 : i32
    %c0_i32_1 = arith.constant 0 : i32
    return %c0_i32, %c0_i32_0 : i32, i32
  }
  func.func @transform_4(%arg0: i32) -> (i32, i32) {
    %c0_i32 = arith.constant 0 : i32
    %c0_i32_0 = arith.constant 0 : i32
    %c0_i32_1 = arith.constant 0 : i32
    return %c0_i32, %c0_i32_0 : i32, i32
  }
  func.func @transform_5(%arg0: i32) -> (i32, i32) {
    %c0_i32 = arith.constant 0 : i32
    %c0_i32_0 = arith.constant 0 : i32
    %c0_i32_1 = arith.constant 0 : i32
    return %c0_i32, %c0_i32_0 : i32, i32
  }
  func.func @transform_6(%arg0: i32) -> (i32, i32) {
    %c0_i32 = arith.constant 0 : i32
    %c0_i32_0 = arith.constant 0 : i32
    %c0_i32_1 = arith.constant 0 : i32
    return %c0_i32, %c0_i32_0 : i32, i32
  }
  func.func @transform_7(%arg0: i32) -> (i32, i32) {
    %c0_i32 = arith.constant 0 : i32
    %c0_i32_0 = arith.constant 0 : i32
    return %arg0, %c0_i32 : i32, i32
  }
}

module attributes {stable_mosaic.version = 11 : i64} {
  func.func @actor_kernel(%arg0: i32, %arg1: memref<8x128xf32, #tpu.memory_space<vmem>>, %arg2: memref<128x128xf32, #tpu.memory_space<vmem>>, %arg3: memref<1x128xf32, #tpu.memory_space<vmem>>, %arg4: memref<128x128xf32, #tpu.memory_space<vmem>>, %arg5: memref<1x128xf32, #tpu.memory_space<vmem>>, %arg6: memref<128x128xf32, #tpu.memory_space<vmem>>, %arg7: memref<1x128xf32, #tpu.memory_space<vmem>>, %arg8: memref<8x128xf32, #tpu.memory_space<vmem>>) attributes {dimension_semantics = [#tpu.dimension_semantics<parallel>], iteration_bounds = array<i64: 1>, scalar_prefetch = 0 : i64, scratch_operands = 0 : i64, tpu.core_type = #tpu.core_type<tc>, window_params = [{transform_indices = @transform_0, window_bounds = array<i64: 8, 128>}, {pipeline_mode = #tpu.pipeline_mode<synchronous>, transform_indices = @transform_1, window_bounds = array<i64: 128, 128>}, {pipeline_mode = #tpu.pipeline_mode<synchronous>, transform_indices = @transform_2, window_bounds = array<i64: 1, 128>}, {pipeline_mode = #tpu.pipeline_mode<synchronous>, transform_indices = @transform_3, window_bounds = array<i64: 128, 128>}, {pipeline_mode = #tpu.pipeline_mode<synchronous>, transform_indices = @transform_4, window_bounds = array<i64: 1, 128>}, {pipeline_mode = #tpu.pipeline_mode<synchronous>, transform_indices = @transform_5, window_bounds = array<i64: 128, 128>}, {pipeline_mode = #tpu.pipeline_mode<synchronous>, transform_indices = @transform_6, window_bounds = array<i64: 1, 128>}, {transform_indices = @transform_7, window_bounds = array<i64: 8, 128>}]} {
    %c0 = arith.constant 0 : index
    %c0_0 = arith.constant 0 : index
    %0 = vector.load %arg1[%c0, %c0_0] : memref<8x128xf32, #tpu.memory_space<vmem>>, vector<8x128xf32>
    %c0_1 = arith.constant 0 : index
    %c0_2 = arith.constant 0 : index
    %1 = vector.load %arg2[%c0_1, %c0_2] : memref<128x128xf32, #tpu.memory_space<vmem>>, vector<128x128xf32>
    %cst = arith.constant dense<0.000000e+00> : vector<8x128xf32>
    %2 = tpu.matmul %0, %1, %cst {dimension_numbers = #tpu.dot_dimension_numbers<[1], [0], [0], [1], [0, 0, 1, 1], [], []>, precision = #tpu.contract_precision<fp32>} : vector<8x128xf32>, vector<128x128xf32>, vector<8x128xf32> -> vector<8x128xf32>
    %c0_3 = arith.constant 0 : index
    %c0_4 = arith.constant 0 : index
    %3 = vector.load %arg3[%c0_3, %c0_4] : memref<1x128xf32, #tpu.memory_space<vmem>>, vector<1x128xf32>
    %4 = vector.broadcast %3 : vector<1x128xf32> to vector<8x128xf32>
    %5 = arith.addf %2, %4 : vector<8x128xf32>
    %cst_5 = arith.constant 0.000000e+00 : f32
    %6 = vector.broadcast %cst_5 : f32 to vector<8x128xf32>
    %7 = arith.maximumf %5, %6 : vector<8x128xf32>
    %c0_6 = arith.constant 0 : index
    %c0_7 = arith.constant 0 : index
    %8 = vector.load %arg4[%c0_6, %c0_7] : memref<128x128xf32, #tpu.memory_space<vmem>>, vector<128x128xf32>
    %cst_8 = arith.constant dense<0.000000e+00> : vector<8x128xf32>
    %9 = tpu.matmul %7, %8, %cst_8 {dimension_numbers = #tpu.dot_dimension_numbers<[1], [0], [0], [1], [0, 0, 1, 1], [], []>, precision = #tpu.contract_precision<fp32>} : vector<8x128xf32>, vector<128x128xf32>, vector<8x128xf32> -> vector<8x128xf32>
    %c0_9 = arith.constant 0 : index
    %c0_10 = arith.constant 0 : index
    %10 = vector.load %arg5[%c0_9, %c0_10] : memref<1x128xf32, #tpu.memory_space<vmem>>, vector<1x128xf32>
    %11 = vector.broadcast %10 : vector<1x128xf32> to vector<8x128xf32>
    %12 = arith.addf %9, %11 : vector<8x128xf32>
    %cst_11 = arith.constant 0.000000e+00 : f32
    %13 = vector.broadcast %cst_11 : f32 to vector<8x128xf32>
    %14 = arith.maximumf %12, %13 : vector<8x128xf32>
    %c0_12 = arith.constant 0 : index
    %c0_13 = arith.constant 0 : index
    %15 = vector.load %arg6[%c0_12, %c0_13] : memref<128x128xf32, #tpu.memory_space<vmem>>, vector<128x128xf32>
    %cst_14 = arith.constant dense<0.000000e+00> : vector<8x128xf32>
    %16 = tpu.matmul %14, %15, %cst_14 {dimension_numbers = #tpu.dot_dimension_numbers<[1], [0], [0], [1], [0, 0, 1, 1], [], []>, precision = #tpu.contract_precision<fp32>} : vector<8x128xf32>, vector<128x128xf32>, vector<8x128xf32> -> vector<8x128xf32>
    %c0_15 = arith.constant 0 : index
    %c0_16 = arith.constant 0 : index
    %17 = vector.load %arg7[%c0_15, %c0_16] : memref<1x128xf32, #tpu.memory_space<vmem>>, vector<1x128xf32>
    %18 = vector.broadcast %17 : vector<1x128xf32> to vector<8x128xf32>
    %19 = arith.addf %16, %18 : vector<8x128xf32>
    %20 = math.tanh %19 : vector<8x128xf32>
    %c0_17 = arith.constant 0 : index
    %c0_18 = arith.constant 0 : index
    %21 = vector.load %arg8[%c0_17, %c0_18] : memref<8x128xf32, #tpu.memory_space<vmem>>, vector<8x128xf32>
    tpu.vector_store %arg8[%c0_17, %c0_18], %20 {strides = array<i32>} : memref<8x128xf32, #tpu.memory_space<vmem>>, vector<8x128xf32>,
    return
  }
  func.func @transform_0(%arg0: i32) -> (i32, i32) {
    %c0_i32 = arith.constant 0 : i32
    %c0_i32_0 = arith.constant 0 : i32
    return %arg0, %c0_i32 : i32, i32
  }
  func.func @transform_1(%arg0: i32) -> (i32, i32) {
    %c0_i32 = arith.constant 0 : i32
    %c0_i32_0 = arith.constant 0 : i32
    %c0_i32_1 = arith.constant 0 : i32
    return %c0_i32, %c0_i32_0 : i32, i32
  }
  func.func @transform_2(%arg0: i32) -> (i32, i32) {
    %c0_i32 = arith.constant 0 : i32
    %c0_i32_0 = arith.constant 0 : i32
    %c0_i32_1 = arith.constant 0 : i32
    return %c0_i32, %c0_i32_0 : i32, i32
  }
  func.func @transform_3(%arg0: i32) -> (i32, i32) {
    %c0_i32 = arith.constant 0 : i32
    %c0_i32_0 = arith.constant 0 : i32
    %c0_i32_1 = arith.constant 0 : i32
    return %c0_i32, %c0_i32_0 : i32, i32
  }
  func.func @transform_4(%arg0: i32) -> (i32, i32) {
    %c0_i32 = arith.constant 0 : i32
    %c0_i32_0 = arith.constant 0 : i32
    %c0_i32_1 = arith.constant 0 : i32
    return %c0_i32, %c0_i32_0 : i32, i32
  }
  func.func @transform_5(%arg0: i32) -> (i32, i32) {
    %c0_i32 = arith.constant 0 : i32
    %c0_i32_0 = arith.constant 0 : i32
    %c0_i32_1 = arith.constant 0 : i32
    return %c0_i32, %c0_i32_0 : i32, i32
  }
  func.func @transform_6(%arg0: i32) -> (i32, i32) {
    %c0_i32 = arith.constant 0 : i32
    %c0_i32_0 = arith.constant 0 : i32
    %c0_i32_1 = arith.constant 0 : i32
    return %c0_i32, %c0_i32_0 : i32, i32
  }
  func.func @transform_7(%arg0: i32) -> (i32, i32) {
    %c0_i32 = arith.constant 0 : i32
    %c0_i32_0 = arith.constant 0 : i32
    return %arg0, %c0_i32 : i32, i32
  }
}

</mosaic_0001>

<llo_original>
// kernel: tpu_custom_call.1
$region0: #{tpu_custom_call.1}
  #allocation0 [shape = 'u32[]', space=smem, size = 0x4, offset = 0x4, fixed_abs, tag = 'smem constant byte address 0x4 - core index']
  #allocation1 [shape = 'u32[72,128]{1,0:T(1,128)}', space=vmem, size = 0x9000, scoped, tag = 'internal scratch']
  %s0 = inlined_call_operand.hbm [shape: f32[8,128], index: 0, kind: input, shape index: {}]
  %s1 = inlined_call_operand.hbm [shape: f32[128,128], index: 1, kind: input, shape index: {}]
  %s2 = inlined_call_operand.vmem [shape: f32[1,128], index: 2, kind: input, shape index: {}]
  %s3 = inlined_call_operand.hbm [shape: f32[128,128], index: 3, kind: input, shape index: {}]
  %s4 = inlined_call_operand.vmem [shape: f32[1,128], index: 4, kind: input, shape index: {}]
  %s5 = inlined_call_operand.hbm [shape: f32[128,128], index: 5, kind: input, shape index: {}]
  %s6 = inlined_call_operand.vmem [shape: f32[1,128], index: 6, kind: input, shape index: {}]
  %s7 = inlined_call_operand.hbm [shape: f32[8,128], index: 7, kind: output, shape index: {}]
  %s8 = sld [smem:[#allocation0]]
  $region54: #{tpu_custom_call.1} parent=0
    _
  %s10 = ssub.s32 1, %s8
  %s11 = scalar_select 0, %s10, %s8
  $region1: #{tpu_custom_call.1} parent=0
    #allocation2 [shape = 'u8[4096]{0}', space=vmem, size = 0x1000, scoped, tag = 'input window, operand 0, single buffered']
    #allocation3 [shape = 's32[1]{0}', space=sflag, size = 0x4, scoped, tag = 'scoped memory for tpu_custom_call.1']
    #allocation4 [shape = 's32[1]{0}', space=sflag, size = 0x4, scoped, tag = 'scoped memory for tpu_custom_call.1']
    #allocation5 [shape = 'u8[65536]{0}', space=vmem, size = 0x10000, scoped, tag = 'input window, operand 1, single buffered']
    #allocation6 [shape = 's32[1]{0}', space=sflag, size = 0x4, scoped, tag = 'scoped memory for tpu_custom_call.1']
    #allocation7 [shape = 'u8[65536]{0}', space=vmem, size = 0x10000, scoped, tag = 'input window, operand 3, single buffered']
    #allocation8 [shape = 'u8[65536]{0}', space=vmem, size = 0x10000, scoped, tag = 'input window, operand 5, single buffered']
    #allocation9 [shape = 's32[1]{0}', space=sflag, size = 0x4, scoped, tag = 'scoped memory for tpu_custom_call.1']
    #allocation10 [shape = 'u8[4096]{0}', space=vmem, size = 0x1000, scoped, tag = 'output window, operand 0, single buffered']
    %12 = vsyncpa [#allocation3], 0
    %13 = vsyncpa [#allocation6], 0
    %14 = vsyncpa [#allocation9], 0
    %15 = vsyncpa [#allocation4], 0
    // Predicated region
    $region2: #{tpu_custom_call.1} parent=1 // pred_check
      _
    $region3: #{tpu_custom_call.1} parent=1 // pred_check_branch
      %17 = sbr.rel (0) target = $region5
    $region4: #{tpu_custom_call.1} parent=1 // pred_region
      %19 = vsyncadd [#allocation3], 0
      %s21 = sshll.u32 %s0, 4
      %s22 = int_to_ptr.hbm [resolvable:$true] %s21
      %s23 = sshll.u32 [#allocation2], 4
      %s24 = int_to_ptr.vmem [resolvable:$true] %s23
      %26 = dma.hbm_to_vmem [thread:$0]  %s22, 128, %s24, [#allocation3]
    $region5: #{tpu_custom_call.1} parent=1 // pred_fallthru
      _
    // Predicated region
    $region6: #{tpu_custom_call.1} parent=1 // pred_check
      _
    $region7: #{tpu_custom_call.1} parent=1 // pred_check_branch
      %28 = sbr.rel (0) target = $region9
    $region8: #{tpu_custom_call.1} parent=1 // pred_region
      %30 = vsyncadd [#allocation6], 0
      %s31 = sshll.u32 %s1, 4
      %s32 = int_to_ptr.hbm [resolvable:$true] %s31
      %s33 = sshll.u32 [#allocation5], 4
      %s34 = int_to_ptr.vmem [resolvable:$true] %s33
      %39 = dma.hbm_to_vmem [thread:$0]  %s32, 2048, %s34, [#allocation6], 128, 128, 8
    $region9: #{tpu_custom_call.1} parent=1 // pred_fallthru
      _
    // Predicated region
    $region10: #{tpu_custom_call.1} parent=1 // pred_check
      _
    $region11: #{tpu_custom_call.1} parent=1 // pred_check_branch
      %41 = sbr.rel (0) target = $region13
    $region12: #{tpu_custom_call.1} parent=1 // pred_region
      _
    $region13: #{tpu_custom_call.1} parent=1 // pred_fallthru
      _
    // Predicated region
    $region14: #{tpu_custom_call.1} parent=1 // pred_check
      _
    $region15: #{tpu_custom_call.1} parent=1 // pred_check_branch
      %43 = sbr.rel (0) target = $region17
    $region16: #{tpu_custom_call.1} parent=1 // pred_region
      %45 = vsyncadd [#allocation6], 0
      %s46 = sshll.u32 %s3, 4
      %s47 = int_to_ptr.hbm [resolvable:$true] %s46
      %s48 = sshll.u32 [#allocation7], 4
      %s49 = int_to_ptr.vmem [resolvable:$true] %s48
      %54 = dma.hbm_to_vmem [thread:$0]  %s47, 2048, %s49, [#allocation6], 128, 128, 8
    $region17: #{tpu_custom_call.1} parent=1 // pred_fallthru
      _
    // Predicated region
    $region18: #{tpu_custom_call.1} parent=1 // pred_check
      _
    $region19: #{tpu_custom_call.1} parent=1 // pred_check_branch
      %56 = sbr.rel (0) target = $region21
    $region20: #{tpu_custom_call.1} parent=1 // pred_region
      _
    $region21: #{tpu_custom_call.1} parent=1 // pred_fallthru
      _
    // Predicated region
    $region22: #{tpu_custom_call.1} parent=1 // pred_check
      _
    $region23: #{tpu_custom_call.1} parent=1 // pred_check_branch
      %58 = sbr.rel (0) target = $region25
    $region24: #{tpu_custom_call.1} parent=1 // pred_region
      %60 = vsyncadd [#allocation9], 0
      %s61 = sshll.u32 %s5, 4
      %s62 = int_to_ptr.hbm [resolvable:$true] %s61
      %s63 = sshll.u32 [#allocation8], 4
      %s64 = int_to_ptr.vmem [resolvable:$true] %s63
      %69 = dma.hbm_to_vmem [thread:$0]  %s62, 2048, %s64, [#allocation9], 128, 128, 8
    $region25: #{tpu_custom_call.1} parent=1 // pred_fallthru
      _
    // Predicated region
    $region26: #{tpu_custom_call.1} parent=1 // pred_check
      _
    $region27: #{tpu_custom_call.1} parent=1 // pred_check_branch
      %71 = sbr.rel (0) target = $region29
    $region28: #{tpu_custom_call.1} parent=1 // pred_region
      _
    $region29: #{tpu_custom_call.1} parent=1 // pred_fallthru
      _
    // Predicated region
    $region30: #{tpu_custom_call.1} parent=1 // pred_check
      _
    $region31: #{tpu_custom_call.1} parent=1 // pred_check_branch
      %73 = sbr.rel (0) target = $region33
    $region32: #{tpu_custom_call.1} parent=1 // pred_region
      %75 = dma.done [#allocation3], 128
    $region33: #{tpu_custom_call.1} parent=1 // pred_fallthru
      _
    // Predicated region
    $region34: #{tpu_custom_call.1} parent=1 // pred_check
      _
    $region35: #{tpu_custom_call.1} parent=1 // pred_check_branch
      %77 = sbr.rel (0) target = $region37
    $region36: #{tpu_custom_call.1} parent=1 // pred_region
      %79 = dma.done [#allocation6], 2048
    $region37: #{tpu_custom_call.1} parent=1 // pred_fallthru
      _
    // Predicated region
    $region38: #{tpu_custom_call.1} parent=1 // pred_check
      _
    $region39: #{tpu_custom_call.1} parent=1 // pred_check_branch
      %81 = sbr.rel (0) target = $region41
    $region40: #{tpu_custom_call.1} parent=1 // pred_region
      %83 = dma.done [#allocation6], 2048
    $region41: #{tpu_custom_call.1} parent=1 // pred_fallthru
      _
    // Predicated region
    $region42: #{tpu_custom_call.1} parent=1 // pred_check
      _
    $region43: #{tpu_custom_call.1} parent=1 // pred_check_branch
      %85 = sbr.rel (0) target = $region45
    $region44: #{tpu_custom_call.1} parent=1 // pred_region
      %87 = dma.done [#allocation9], 2048
    $region45: #{tpu_custom_call.1} parent=1 // pred_fallthru
      _
    %v88 = vld [vmem:[#allocation2] sm:$0xff]
    %v89 = vld [vmem:[#allocation5] sm:$0xff]
    %v90 = vld [vmem:[#allocation5 + $0x8] sm:$0xff]
    %v91 = vld [vmem:[#allocation5 + $0x10] sm:$0xff]
    %v92 = vld [vmem:[#allocation5 + $0x18] sm:$0xff]
    %v93 = vld [vmem:[#allocation5 + $0x20] sm:$0xff]
    %v94 = vld [vmem:[#allocation5 + $0x28] sm:$0xff]
    %v95 = vld [vmem:[#allocation5 + $0x30] sm:$0xff]
    %v96 = vld [vmem:[#allocation5 + $0x38] sm:$0xff]
    %v97 = vld [vmem:[#allocation5 + $0x40] sm:$0xff]
    %v98 = vld [vmem:[#allocation5 + $0x48] sm:$0xff]
    %v99 = vld [vmem:[#allocation5 + $0x50] sm:$0xff]
    %v100 = vld [vmem:[#allocation5 + $0x58] sm:$0xff]
    %v101 = vld [vmem:[#allocation5 + $0x60] sm:$0xff]
    %v102 = vld [vmem:[#allocation5 + $0x68] sm:$0xff]
    %v103 = vld [vmem:[#allocation5 + $0x70] sm:$0xff]
    %v104 = vld [vmem:[#allocation5 + $0x78] sm:$0xff]
    %v105 = vld [vmem:[%s2] sm:$0x1]
    %v107 = vperm.slane %v105, 0
    %v109 = vand.u32 %v104, 4294901760
    %110 = vmatpush.msra.mxu0 %v109
    %v111 = vand.u32 %v103, 4294901760
    %112 = vmatpush.msra.mxu0 %v111
    %v113 = vand.u32 %v102, 4294901760
    %114 = vmatpush.msra.mxu0 %v113
    %v115 = vand.u32 %v101, 4294901760
    %116 = vmatpush.msra.mxu0 %v115
    %v117 = vand.u32 %v100, 4294901760
    %118 = vmatpush.msra.mxu0 %v117
    %v119 = vand.u32 %v99, 4294901760
    %120 = vmatpush.msra.mxu0 %v119
    %v121 = vand.u32 %v98, 4294901760
    %122 = vmatpush.msra.mxu0 %v121
    %v123 = vand.u32 %v97, 4294901760
    %124 = vmatpush.msra.mxu0 %v123
    %v125 = vand.u32 %v96, 4294901760
    %126 = vmatpush.msra.mxu0 %v125
    %v127 = vand.u32 %v95, 4294901760
    %128 = vmatpush.msra.mxu0 %v127
    %v129 = vand.u32 %v94, 4294901760
    %130 = vmatpush.msra.mxu0 %v129
    %v131 = vand.u32 %v93, 4294901760
    %132 = vmatpush.msra.mxu0 %v131
    %v133 = vand.u32 %v92, 4294901760
    %134 = vmatpush.msra.mxu0 %v133
    %v135 = vand.u32 %v91, 4294901760
    %136 = vmatpush.msra.mxu0 %v135
    %v137 = vand.u32 %v90, 4294901760
    %138 = vmatpush.msra.mxu0 %v137
    %v139 = vand.u32 %v89, 4294901760
    %140 = vmatpush.msra.mxu0 %v139
    %v141 = vand.u32 %v88, 4294901760
    %v142 = vsub.f32 %v88, %v141
    %v143 = vand.u32 %v142, 4294901760
    %v144 = vsub.f32 %v142, %v143
    %v145 = vand.u32 %v144, 4294901760
    %146 = vmatmul.f32.gmra.mxu0 %v145
    %v147 = vpop.f32.mrf.mxu0
    %v148 = vadd.f32 %v107, %v147
    %149 = vdwg.mxu0
    %v150 = vand.u32 %v104, 4294901760
    %v151 = vsub.f32 %v104, %v150
    %v152 = vand.u32 %v151, 4294901760
    %v153 = vsub.f32 %v151, %v152
    %v154 = vand.u32 %v153, 4294901760
    %155 = vmatpush.msra.mxu0 %v154
    %v156 = vand.u32 %v103, 4294901760
    %v157 = vsub.f32 %v103, %v156
    %v158 = vand.u32 %v157, 4294901760
    %v159 = vsub.f32 %v157, %v158
    %v160 = vand.u32 %v159, 4294901760
    %161 = vmatpush.msra.mxu0 %v160
    %v162 = vand.u32 %v102, 4294901760
    %v163 = vsub.f32 %v102, %v162
    %v164 = vand.u32 %v163, 4294901760
    %v165 = vsub.f32 %v163, %v164
    %v166 = vand.u32 %v165, 4294901760
    %167 = vmatpush.msra.mxu0 %v166
    %v168 = vand.u32 %v101, 4294901760
    %v169 = vsub.f32 %v101, %v168
    %v170 = vand.u32 %v169, 4294901760
    %v171 = vsub.f32 %v169, %v170
    %v172 = vand.u32 %v171, 4294901760
    %173 = vmatpush.msra.mxu0 %v172
    %v174 = vand.u32 %v100, 4294901760
    %v175 = vsub.f32 %v100, %v174
    %v176 = vand.u32 %v175, 4294901760
    %v177 = vsub.f32 %v175, %v176
    %v178 = vand.u32 %v177, 4294901760
    %179 = vmatpush.msra.mxu0 %v178
    %v180 = vand.u32 %v99, 4294901760
    %v181 = vsub.f32 %v99, %v180
    %v182 = vand.u32 %v181, 4294901760
    %v183 = vsub.f32 %v181, %v182
    %v184 = vand.u32 %v183, 4294901760
    %185 = vmatpush.msra.mxu0 %v184
    %v186 = vand.u32 %v98, 4294901760
    %v187 = vsub.f32 %v98, %v186
    %v188 = vand.u32 %v187, 4294901760
    %v189 = vsub.f32 %v187, %v188
    %v190 = vand.u32 %v189, 4294901760
    %191 = vmatpush.msra.mxu0 %v190
    %v192 = vand.u32 %v97, 4294901760
    %v193 = vsub.f32 %v97, %v192
    %v194 = vand.u32 %v193, 4294901760
    %v195 = vsub.f32 %v193, %v194
    %v196 = vand.u32 %v195, 4294901760
    %197 = vmatpush.msra.mxu0 %v196
    %v198 = vand.u32 %v96, 4294901760
    %v199 = vsub.f32 %v96, %v198
    %v200 = vand.u32 %v199, 4294901760
    %v201 = vsub.f32 %v199, %v200
    %v202 = vand.u32 %v201, 4294901760
    %203 = vmatpush.msra.mxu0 %v202
    %v204 = vand.u32 %v95, 4294901760
    %v205 = vsub.f32 %v95, %v204
    %v206 = vand.u32 %v205, 4294901760
    %v207 = vsub.f32 %v205, %v206
    %v208 = vand.u32 %v207, 4294901760
    %209 = vmatpush.msra.mxu0 %v208
    %v210 = vand.u32 %v94, 4294901760
    %v211 = vsub.f32 %v94, %v210
    %v212 = vand.u32 %v211, 4294901760
    %v213 = vsub.f32 %v211, %v212
    %v214 = vand.u32 %v213, 4294901760
    %215 = vmatpush.msra.mxu0 %v214
    %v216 = vand.u32 %v93, 4294901760
    %v217 = vsub.f32 %v93, %v216
    %v218 = vand.u32 %v217, 4294901760
    %v219 = vsub.f32 %v217, %v218
    %v220 = vand.u32 %v219, 4294901760
    %221 = vmatpush.msra.mxu0 %v220
    %v222 = vand.u32 %v92, 4294901760
    %v223 = vsub.f32 %v92, %v222
    %v224 = vand.u32 %v223, 4294901760
    %v225 = vsub.f32 %v223, %v224
    %v226 = vand.u32 %v225, 4294901760
    %227 = vmatpush.msra.mxu0 %v226
    %v228 = vand.u32 %v91, 4294901760
    %v229 = vsub.f32 %v91, %v228
    %v230 = vand.u32 %v229, 4294901760
    %v231 = vsub.f32 %v229, %v230
    %v232 = vand.u32 %v231, 4294901760
    %233 = vmatpush.msra.mxu0 %v232
    %v234 = vand.u32 %v90, 4294901760
    %v235 = vsub.f32 %v90, %v234
    %v236 = vand.u32 %v235, 4294901760
    %v237 = vsub.f32 %v235, %v236
    %v238 = vand.u32 %v237, 4294901760
    %239 = vmatpush.msra.mxu0 %v238
    %v240 = vand.u32 %v89, 4294901760
    %v241 = vsub.f32 %v89, %v240
    %v242 = vand.u32 %v241, 4294901760
    %v243 = vsub.f32 %v241, %v242
    %v244 = vand.u32 %v243, 4294901760
    %245 = vmatpush.msra.mxu0 %v244
    %v246 = vand.u32 %v88, 4294901760
    %247 = vmatmul.f32.gmra.mxu0 %v246
    %v248 = vpop.f32.mrf.mxu0
    %v249 = vadd.f32 %v148, %v248
    %250 = vdwg.mxu0
    %v251 = vand.u32 %v104, 4294901760
    %v252 = vsub.f32 %v104, %v251
    %253 = vmatpush.msra.mxu0 %v252
    %v254 = vand.u32 %v103, 4294901760
    %v255 = vsub.f32 %v103, %v254
    %256 = vmatpush.msra.mxu0 %v255
    %v257 = vand.u32 %v102, 4294901760
    %v258 = vsub.f32 %v102, %v257
    %259 = vmatpush.msra.mxu0 %v258
    %v260 = vand.u32 %v101, 4294901760
    %v261 = vsub.f32 %v101, %v260
    %262 = vmatpush.msra.mxu0 %v261
    %v263 = vand.u32 %v100, 4294901760
    %v264 = vsub.f32 %v100, %v263
    %265 = vmatpush.msra.mxu0 %v264
    %v266 = vand.u32 %v99, 4294901760
    %v267 = vsub.f32 %v99, %v266
    %268 = vmatpush.msra.mxu0 %v267
    %v269 = vand.u32 %v98, 4294901760
    %v270 = vsub.f32 %v98, %v269
    %271 = vmatpush.msra.mxu0 %v270
    %v272 = vand.u32 %v97, 4294901760
    %v273 = vsub.f32 %v97, %v272
    %274 = vmatpush.msra.mxu0 %v273
    %v275 = vand.u32 %v96, 4294901760
    %v276 = vsub.f32 %v96, %v275
    %277 = vmatpush.msra.mxu0 %v276
    %v278 = vand.u32 %v95, 4294901760
    %v279 = vsub.f32 %v95, %v278
    %280 = vmatpush.msra.mxu0 %v279
    %v281 = vand.u32 %v94, 4294901760
    %v282 = vsub.f32 %v94, %v281
    %283 = vmatpush.msra.mxu0 %v282
    %v284 = vand.u32 %v93, 4294901760
    %v285 = vsub.f32 %v93, %v284
    %286 = vmatpush.msra.mxu0 %v285
    %v287 = vand.u32 %v92, 4294901760
    %v288 = vsub.f32 %v92, %v287
    %289 = vmatpush.msra.mxu0 %v288
    %v290 = vand.u32 %v91, 4294901760
    %v291 = vsub.f32 %v91, %v290
    %292 = vmatpush.msra.mxu0 %v291
    %v293 = vand.u32 %v90, 4294901760
    %v294 = vsub.f32 %v90, %v293
    %295 = vmatpush.msra.mxu0 %v294
    %v296 = vand.u32 %v89, 4294901760
    %v297 = vsub.f32 %v89, %v296
    %298 = vmatpush.msra.mxu0 %v297
    %v299 = vand.u32 %v88, 4294901760
    %v300 = vsub.f32 %v88, %v299
    %301 = vmatmul.f32.gmra.mxu0 %v300
    %v302 = vpop.f32.mrf.mxu0
    %v303 = vadd.f32 %v249, %v302
    %304 = vdwg.mxu0
    %v305 = vand.u32 %v104, 4294901760
    %306 = vmatpush.msra.mxu0 %v305
    %v307 = vand.u32 %v103, 4294901760
    %308 = vmatpush.msra.mxu0 %v307
    %v309 = vand.u32 %v102, 4294901760
    %310 = vmatpush.msra.mxu0 %v309
    %v311 = vand.u32 %v101, 4294901760
    %312 = vmatpush.msra.mxu0 %v311
    %v313 = vand.u32 %v100, 4294901760
    %314 = vmatpush.msra.mxu0 %v313
    %v315 = vand.u32 %v99, 4294901760
    %316 = vmatpush.msra.mxu0 %v315
    %v317 = vand.u32 %v98, 4294901760
    %318 = vmatpush.msra.mxu0 %v317
    %v319 = vand.u32 %v97, 4294901760
    %320 = vmatpush.msra.mxu0 %v319
    %v321 = vand.u32 %v96, 4294901760
    %322 = vmatpush.msra.mxu0 %v321
    %v323 = vand.u32 %v95, 4294901760
    %324 = vmatpush.msra.mxu0 %v323
    %v325 = vand.u32 %v94, 4294901760
    %326 = vmatpush.msra.mxu0 %v325
    %v327 = vand.u32 %v93, 4294901760
    %328 = vmatpush.msra.mxu0 %v327
    %v329 = vand.u32 %v92, 4294901760
    %330 = vmatpush.msra.mxu0 %v329
    %v331 = vand.u32 %v91, 4294901760
    %332 = vmatpush.msra.mxu0 %v331
    %v333 = vand.u32 %v90, 4294901760
    %334 = vmatpush.msra.mxu0 %v333
    %v335 = vand.u32 %v89, 4294901760
    %336 = vmatpush.msra.mxu0 %v335
    %v337 = vand.u32 %v88, 4294901760
    %v338 = vsub.f32 %v88, %v337
    %v339 = vand.u32 %v338, 4294901760
    %340 = vmatmul.f32.gmra.mxu0 %v339
    %v341 = vpop.f32.mrf.mxu0
    %v342 = vadd.f32 %v303, %v341
    %343 = vdwg.mxu0
    %v344 = vand.u32 %v104, 4294901760
    %v345 = vsub.f32 %v104, %v344
    %v346 = vand.u32 %v345, 4294901760
    %347 = vmatpush.msra.mxu0 %v346
    %v348 = vand.u32 %v103, 4294901760
    %v349 = vsub.f32 %v103, %v348
    %v350 = vand.u32 %v349, 4294901760
    %351 = vmatpush.msra.mxu0 %v350
    %v352 = vand.u32 %v102, 4294901760
    %v353 = vsub.f32 %v102, %v352
    %v354 = vand.u32 %v353, 4294901760
    %355 = vmatpush.msra.mxu0 %v354
    %v356 = vand.u32 %v101, 4294901760
    %v357 = vsub.f32 %v101, %v356
    %v358 = vand.u32 %v357, 4294901760
    %359 = vmatpush.msra.mxu0 %v358
    %v360 = vand.u32 %v100, 4294901760
    %v361 = vsub.f32 %v100, %v360
    %v362 = vand.u32 %v361, 4294901760
    %363 = vmatpush.msra.mxu0 %v362
    %v364 = vand.u32 %v99, 4294901760
    %v365 = vsub.f32 %v99, %v364
    %v366 = vand.u32 %v365, 4294901760
    %367 = vmatpush.msra.mxu0 %v366
    %v368 = vand.u32 %v98, 4294901760
    %v369 = vsub.f32 %v98, %v368
    %v370 = vand.u32 %v369, 4294901760
    %371 = vmatpush.msra.mxu0 %v370
    %v372 = vand.u32 %v97, 4294901760
    %v373 = vsub.f32 %v97, %v372
    %v374 = vand.u32 %v373, 4294901760
    %375 = vmatpush.msra.mxu0 %v374
    %v376 = vand.u32 %v96, 4294901760
    %v377 = vsub.f32 %v96, %v376
    %v378 = vand.u32 %v377, 4294901760
    %379 = vmatpush.msra.mxu0 %v378
    %v380 = vand.u32 %v95, 4294901760
    %v381 = vsub.f32 %v95, %v380
    %v382 = vand.u32 %v381, 4294901760
    %383 = vmatpush.msra.mxu0 %v382
    %v384 = vand.u32 %v94, 4294901760
    %v385 = vsub.f32 %v94, %v384
    %v386 = vand.u32 %v385, 4294901760
    %387 = vmatpush.msra.mxu0 %v386
    %v388 = vand.u32 %v93, 4294901760
    %v389 = vsub.f32 %v93, %v388
    %v390 = vand.u32 %v389, 4294901760
    %391 = vmatpush.msra.mxu0 %v390
    %v392 = vand.u32 %v92, 4294901760
    %v393 = vsub.f32 %v92, %v392
    %v394 = vand.u32 %v393, 4294901760
    %395 = vmatpush.msra.mxu0 %v394
    %v396 = vand.u32 %v91, 4294901760
    %v397 = vsub.f32 %v91, %v396
    %v398 = vand.u32 %v397, 4294901760
    %399 = vmatpush.msra.mxu0 %v398
    %v400 = vand.u32 %v90, 4294901760
    %v401 = vsub.f32 %v90, %v400
    %v402 = vand.u32 %v401, 4294901760
    %403 = vmatpush.msra.mxu0 %v402
    %v404 = vand.u32 %v89, 4294901760
    %v405 = vsub.f32 %v89, %v404
    %v406 = vand.u32 %v405, 4294901760
    %407 = vmatpush.msra.mxu0 %v406
    %v408 = vand.u32 %v88, 4294901760
    %409 = vmatmul.f32.gmra.mxu0 %v408
    %v410 = vpop.f32.mrf.mxu0
    %v411 = vadd.f32 %v342, %v410
    %412 = vdwg.mxu0
    %v413 = vand.u32 %v104, 4294901760
    %414 = vmatpush.msra.mxu0 %v413
    %v415 = vand.u32 %v103, 4294901760
    %416 = vmatpush.msra.mxu0 %v415
    %v417 = vand.u32 %v102, 4294901760
    %418 = vmatpush.msra.mxu0 %v417
    %v419 = vand.u32 %v101, 4294901760
    %420 = vmatpush.msra.mxu0 %v419
    %v421 = vand.u32 %v100, 4294901760
    %422 = vmatpush.msra.mxu0 %v421
    %v423 = vand.u32 %v99, 4294901760
    %424 = vmatpush.msra.mxu0 %v423
    %v425 = vand.u32 %v98, 4294901760
    %426 = vmatpush.msra.mxu0 %v425
    %v427 = vand.u32 %v97, 4294901760
    %428 = vmatpush.msra.mxu0 %v427
    %v429 = vand.u32 %v96, 4294901760
    %430 = vmatpush.msra.mxu0 %v429
    %v431 = vand.u32 %v95, 4294901760
    %432 = vmatpush.msra.mxu0 %v431
    %v433 = vand.u32 %v94, 4294901760
    %434 = vmatpush.msra.mxu0 %v433
    %v435 = vand.u32 %v93, 4294901760
    %436 = vmatpush.msra.mxu0 %v435
    %v437 = vand.u32 %v92, 4294901760
    %438 = vmatpush.msra.mxu0 %v437
    %v439 = vand.u32 %v91, 4294901760
    %440 = vmatpush.msra.mxu0 %v439
    %v441 = vand.u32 %v90, 4294901760
    %442 = vmatpush.msra.mxu0 %v441
    %v443 = vand.u32 %v89, 4294901760
    %444 = vmatpush.msra.mxu0 %v443
    %v445 = vand.u32 %v88, 4294901760
    %446 = vmatmul.f32.gmra.mxu0 %v445
    %v447 = vpop.f32.mrf.mxu0
    %v448 = vadd.f32 %v411, %v447
    %449 = vdwg.mxu0
    %v450 = vmax.f32 %v448, 0.0
    %v451 = vld [vmem:[#allocation7] sm:$0xff]
    %v452 = vld [vmem:[#allocation7 + $0x8] sm:$0xff]
    %v453 = vld [vmem:[#allocation7 + $0x10] sm:$0xff]
    %v454 = vld [vmem:[#allocation7 + $0x18] sm:$0xff]
    %v455 = vld [vmem:[#allocation7 + $0x20] sm:$0xff]
    %v456 = vld [vmem:[#allocation7 + $0x28] sm:$0xff]
    %v457 = vld [vmem:[#allocation7 + $0x30] sm:$0xff]
    %v458 = vld [vmem:[#allocation7 + $0x38] sm:$0xff]
    %v459 = vld [vmem:[#allocation7 + $0x40] sm:$0xff]
    %v460 = vld [vmem:[#allocation7 + $0x48] sm:$0xff]
    %v461 = vld [vmem:[#allocation7 + $0x50] sm:$0xff]
    %v462 = vld [vmem:[#allocation7 + $0x58] sm:$0xff]
    %v463 = vld [vmem:[#allocation7 + $0x60] sm:$0xff]
    %v464 = vld [vmem:[#allocation7 + $0x68] sm:$0xff]
    %v465 = vld [vmem:[#allocation7 + $0x70] sm:$0xff]
    %v466 = vld [vmem:[#allocation7 + $0x78] sm:$0xff]
    %v467 = vld [vmem:[%s4] sm:$0x1]
    %v469 = vperm.slane %v467, 0
    %v471 = vand.u32 %v466, 4294901760
    %472 = vmatpush.msra.mxu0 %v471
    %v473 = vand.u32 %v465, 4294901760
    %474 = vmatpush.msra.mxu0 %v473
    %v475 = vand.u32 %v464, 4294901760
    %476 = vmatpush.msra.mxu0 %v475
    %v477 = vand.u32 %v463, 4294901760
    %478 = vmatpush.msra.mxu0 %v477
    %v479 = vand.u32 %v462, 4294901760
    %480 = vmatpush.msra.mxu0 %v479
    %v481 = vand.u32 %v461, 4294901760
    %482 = vmatpush.msra.mxu0 %v481
    %v483 = vand.u32 %v460, 4294901760
    %484 = vmatpush.msra.mxu0 %v483
    %v485 = vand.u32 %v459, 4294901760
    %486 = vmatpush.msra.mxu0 %v485
    %v487 = vand.u32 %v458, 4294901760
    %488 = vmatpush.msra.mxu0 %v487
    %v489 = vand.u32 %v457, 4294901760
    %490 = vmatpush.msra.mxu0 %v489
    %v491 = vand.u32 %v456, 4294901760
    %492 = vmatpush.msra.mxu0 %v491
    %v493 = vand.u32 %v455, 4294901760
    %494 = vmatpush.msra.mxu0 %v493
    %v495 = vand.u32 %v454, 4294901760
    %496 = vmatpush.msra.mxu0 %v495
    %v497 = vand.u32 %v453, 4294901760
    %498 = vmatpush.msra.mxu0 %v497
    %v499 = vand.u32 %v452, 4294901760
    %500 = vmatpush.msra.mxu0 %v499
    %v501 = vand.u32 %v451, 4294901760
    %502 = vmatpush.msra.mxu0 %v501
    %v503 = vand.u32 %v450, 4294901760
    %v504 = vsub.f32 %v450, %v503
    %v505 = vand.u32 %v504, 4294901760
    %v506 = vsub.f32 %v504, %v505
    %v507 = vand.u32 %v506, 4294901760
    %508 = vmatmul.f32.gmra.mxu0 %v507
    %v509 = vpop.f32.mrf.mxu0
    %v510 = vadd.f32 %v469, %v509
    %511 = vdwg.mxu0
    %v512 = vand.u32 %v466, 4294901760
    %v513 = vsub.f32 %v466, %v512
    %v514 = vand.u32 %v513, 4294901760
    %v515 = vsub.f32 %v513, %v514
    %v516 = vand.u32 %v515, 4294901760
    %517 = vmatpush.msra.mxu0 %v516
    %v518 = vand.u32 %v465, 4294901760
    %v519 = vsub.f32 %v465, %v518
    %v520 = vand.u32 %v519, 4294901760
    %v521 = vsub.f32 %v519, %v520
    %v522 = vand.u32 %v521, 4294901760
    %523 = vmatpush.msra.mxu0 %v522
    %v524 = vand.u32 %v464, 4294901760
    %v525 = vsub.f32 %v464, %v524
    %v526 = vand.u32 %v525, 4294901760
    %v527 = vsub.f32 %v525, %v526
    %v528 = vand.u32 %v527, 4294901760
    %529 = vmatpush.msra.mxu0 %v528
    %v530 = vand.u32 %v463, 4294901760
    %v531 = vsub.f32 %v463, %v530
    %v532 = vand.u32 %v531, 4294901760
    %v533 = vsub.f32 %v531, %v532
    %v534 = vand.u32 %v533, 4294901760
    %535 = vmatpush.msra.mxu0 %v534
    %v536 = vand.u32 %v462, 4294901760
    %v537 = vsub.f32 %v462, %v536
    %v538 = vand.u32 %v537, 4294901760
    %v539 = vsub.f32 %v537, %v538
    %v540 = vand.u32 %v539, 4294901760
    %541 = vmatpush.msra.mxu0 %v540
    %v542 = vand.u32 %v461, 4294901760
    %v543 = vsub.f32 %v461, %v542
    %v544 = vand.u32 %v543, 4294901760
    %v545 = vsub.f32 %v543, %v544
    %v546 = vand.u32 %v545, 4294901760
    %547 = vmatpush.msra.mxu0 %v546
    %v548 = vand.u32 %v460, 4294901760
    %v549 = vsub.f32 %v460, %v548
    %v550 = vand.u32 %v549, 4294901760
    %v551 = vsub.f32 %v549, %v550
    %v552 = vand.u32 %v551, 4294901760
    %553 = vmatpush.msra.mxu0 %v552
    %v554 = vand.u32 %v459, 4294901760
    %v555 = vsub.f32 %v459, %v554
    %v556 = vand.u32 %v555, 4294901760
    %v557 = vsub.f32 %v555, %v556
    %v558 = vand.u32 %v557, 4294901760
    %559 = vmatpush.msra.mxu0 %v558
    %v560 = vand.u32 %v458, 4294901760
    %v561 = vsub.f32 %v458, %v560
    %v562 = vand.u32 %v561, 4294901760
    %v563 = vsub.f32 %v561, %v562
    %v564 = vand.u32 %v563, 4294901760
    %565 = vmatpush.msra.mxu0 %v564
    %v566 = vand.u32 %v457, 4294901760
    %v567 = vsub.f32 %v457, %v566
    %v568 = vand.u32 %v567, 4294901760
    %v569 = vsub.f32 %v567, %v568
    %v570 = vand.u32 %v569, 4294901760
    %571 = vmatpush.msra.mxu0 %v570
    %v572 = vand.u32 %v456, 4294901760
    %v573 = vsub.f32 %v456, %v572
    %v574 = vand.u32 %v573, 4294901760
    %v575 = vsub.f32 %v573, %v574
    %v576 = vand.u32 %v575, 4294901760
    %577 = vmatpush.msra.mxu0 %v576
    %v578 = vand.u32 %v455, 4294901760
    %v579 = vsub.f32 %v455, %v578
    %v580 = vand.u32 %v579, 4294901760
    %v581 = vsub.f32 %v579, %v580
    %v582 = vand.u32 %v581, 4294901760
    %583 = vmatpush.msra.mxu0 %v582
    %v584 = vand.u32 %v454, 4294901760
    %v585 = vsub.f32 %v454, %v584
    %v586 = vand.u32 %v585, 4294901760
    %v587 = vsub.f32 %v585, %v586
    %v588 = vand.u32 %v587, 4294901760
    %589 = vmatpush.msra.mxu0 %v588
    %v590 = vand.u32 %v453, 4294901760
    %v591 = vsub.f32 %v453, %v590
    %v592 = vand.u32 %v591, 4294901760
    %v593 = vsub.f32 %v591, %v592
    %v594 = vand.u32 %v593, 4294901760
    %595 = vmatpush.msra.mxu0 %v594
    %v596 = vand.u32 %v452, 4294901760
    %v597 = vsub.f32 %v452, %v596
    %v598 = vand.u32 %v597, 4294901760
    %v599 = vsub.f32 %v597, %v598
    %v600 = vand.u32 %v599, 4294901760
    %601 = vmatpush.msra.mxu0 %v600
    %v602 = vand.u32 %v451, 4294901760
    %v603 = vsub.f32 %v451, %v602
    %v604 = vand.u32 %v603, 4294901760
    %v605 = vsub.f32 %v603, %v604
    %v606 = vand.u32 %v605, 4294901760
    %607 = vmatpush.msra.mxu0 %v606
    %v608 = vand.u32 %v450, 4294901760
    %609 = vmatmul.f32.gmra.mxu0 %v608
    %v610 = vpop.f32.mrf.mxu0
    %v611 = vadd.f32 %v510, %v610
    %612 = vdwg.mxu0
    %v613 = vand.u32 %v466, 4294901760
    %v614 = vsub.f32 %v466, %v613
    %615 = vmatpush.msra.mxu0 %v614
    %v616 = vand.u32 %v465, 4294901760
    %v617 = vsub.f32 %v465, %v616
    %618 = vmatpush.msra.mxu0 %v617
    %v619 = vand.u32 %v464, 4294901760
    %v620 = vsub.f32 %v464, %v619
    %621 = vmatpush.msra.mxu0 %v620
    %v622 = vand.u32 %v463, 4294901760
    %v623 = vsub.f32 %v463, %v622
    %624 = vmatpush.msra.mxu0 %v623
    %v625 = vand.u32 %v462, 4294901760
    %v626 = vsub.f32 %v462, %v625
    %627 = vmatpush.msra.mxu0 %v626
    %v628 = vand.u32 %v461, 4294901760
    %v629 = vsub.f32 %v461, %v628
    %630 = vmatpush.msra.mxu0 %v629
    %v631 = vand.u32 %v460, 4294901760
    %v632 = vsub.f32 %v460, %v631
    %633 = vmatpush.msra.mxu0 %v632
    %v634 = vand.u32 %v459, 4294901760
    %v635 = vsub.f32 %v459, %v634
    %636 = vmatpush.msra.mxu0 %v635
    %v637 = vand.u32 %v458, 4294901760
    %v638 = vsub.f32 %v458, %v637
    %639 = vmatpush.msra.mxu0 %v638
    %v640 = vand.u32 %v457, 4294901760
    %v641 = vsub.f32 %v457, %v640
    %642 = vmatpush.msra.mxu0 %v641
    %v643 = vand.u32 %v456, 4294901760
    %v644 = vsub.f32 %v456, %v643
    %645 = vmatpush.msra.mxu0 %v644
    %v646 = vand.u32 %v455, 4294901760
    %v647 = vsub.f32 %v455, %v646
    %648 = vmatpush.msra.mxu0 %v647
    %v649 = vand.u32 %v454, 4294901760
    %v650 = vsub.f32 %v454, %v649
    %651 = vmatpush.msra.mxu0 %v650
    %v652 = vand.u32 %v453, 4294901760
    %v653 = vsub.f32 %v453, %v652
    %654 = vmatpush.msra.mxu0 %v653
    %v655 = vand.u32 %v452, 4294901760
    %v656 = vsub.f32 %v452, %v655
    %657 = vmatpush.msra.mxu0 %v656
    %v658 = vand.u32 %v451, 4294901760
    %v659 = vsub.f32 %v451, %v658
    %660 = vmatpush.msra.mxu0 %v659
    %v661 = vand.u32 %v450, 4294901760
    %v662 = vsub.f32 %v450, %v661
    %663 = vmatmul.f32.gmra.mxu0 %v662
    %v664 = vpop.f32.mrf.mxu0
    %v665 = vadd.f32 %v611, %v664
    %666 = vdwg.mxu0
    %v667 = vand.u32 %v466, 4294901760
    %668 = vmatpush.msra.mxu0 %v667
    %v669 = vand.u32 %v465, 4294901760
    %670 = vmatpush.msra.mxu0 %v669
    %v671 = vand.u32 %v464, 4294901760
    %672 = vmatpush.msra.mxu0 %v671
    %v673 = vand.u32 %v463, 4294901760
    %674 = vmatpush.msra.mxu0 %v673
    %v675 = vand.u32 %v462, 4294901760
    %676 = vmatpush.msra.mxu0 %v675
    %v677 = vand.u32 %v461, 4294901760
    %678 = vmatpush.msra.mxu0 %v677
    %v679 = vand.u32 %v460, 4294901760
    %680 = vmatpush.msra.mxu0 %v679
    %v681 = vand.u32 %v459, 4294901760
    %682 = vmatpush.msra.mxu0 %v681
    %v683 = vand.u32 %v458, 4294901760
    %684 = vmatpush.msra.mxu0 %v683
    %v685 = vand.u32 %v457, 4294901760
    %686 = vmatpush.msra.mxu0 %v685
    %v687 = vand.u32 %v456, 4294901760
    %688 = vmatpush.msra.mxu0 %v687
    %v689 = vand.u32 %v455, 4294901760
    %690 = vmatpush.msra.mxu0 %v689
    %v691 = vand.u32 %v454, 4294901760
    %692 = vmatpush.msra.mxu0 %v691
    %v693 = vand.u32 %v453, 4294901760
    %694 = vmatpush.msra.mxu0 %v693
    %v695 = vand.u32 %v452, 4294901760
    %696 = vmatpush.msra.mxu0 %v695
    %v697 = vand.u32 %v451, 4294901760
    %698 = vmatpush.msra.mxu0 %v697
    %v699 = vand.u32 %v450, 4294901760
    %v700 = vsub.f32 %v450, %v699
    %v701 = vand.u32 %v700, 4294901760
    %702 = vmatmul.f32.gmra.mxu0 %v701
    %v703 = vpop.f32.mrf.mxu0
    %v704 = vadd.f32 %v665, %v703
    %705 = vdwg.mxu0
    %v706 = vand.u32 %v466, 4294901760
    %v707 = vsub.f32 %v466, %v706
    %v708 = vand.u32 %v707, 4294901760
    %709 = vmatpush.msra.mxu0 %v708
    %v710 = vand.u32 %v465, 4294901760
    %v711 = vsub.f32 %v465, %v710
    %v712 = vand.u32 %v711, 4294901760
    %713 = vmatpush.msra.mxu0 %v712
    %v714 = vand.u32 %v464, 4294901760
    %v715 = vsub.f32 %v464, %v714
    %v716 = vand.u32 %v715, 4294901760
    %717 = vmatpush.msra.mxu0 %v716
    %v718 = vand.u32 %v463, 4294901760
    %v719 = vsub.f32 %v463, %v718
    %v720 = vand.u32 %v719, 4294901760
    %721 = vmatpush.msra.mxu0 %v720
    %v722 = vand.u32 %v462, 4294901760
    %v723 = vsub.f32 %v462, %v722
    %v724 = vand.u32 %v723, 4294901760
    %725 = vmatpush.msra.mxu0 %v724
    %v726 = vand.u32 %v461, 4294901760
    %v727 = vsub.f32 %v461, %v726
    %v728 = vand.u32 %v727, 4294901760
    %729 = vmatpush.msra.mxu0 %v728
    %v730 = vand.u32 %v460, 4294901760
    %v731 = vsub.f32 %v460, %v730
    %v732 = vand.u32 %v731, 4294901760
    %733 = vmatpush.msra.mxu0 %v732
    %v734 = vand.u32 %v459, 4294901760
    %v735 = vsub.f32 %v459, %v734
    %v736 = vand.u32 %v735, 4294901760
    %737 = vmatpush.msra.mxu0 %v736
    %v738 = vand.u32 %v458, 4294901760
    %v739 = vsub.f32 %v458, %v738
    %v740 = vand.u32 %v739, 4294901760
    %741 = vmatpush.msra.mxu0 %v740
    %v742 = vand.u32 %v457, 4294901760
    %v743 = vsub.f32 %v457, %v742
    %v744 = vand.u32 %v743, 4294901760
    %745 = vmatpush.msra.mxu0 %v744
    %v746 = vand.u32 %v456, 4294901760
    %v747 = vsub.f32 %v456, %v746
    %v748 = vand.u32 %v747, 4294901760
    %749 = vmatpush.msra.mxu0 %v748
    %v750 = vand.u32 %v455, 4294901760
    %v751 = vsub.f32 %v455, %v750
    %v752 = vand.u32 %v751, 4294901760
    %753 = vmatpush.msra.mxu0 %v752
    %v754 = vand.u32 %v454, 4294901760
    %v755 = vsub.f32 %v454, %v754
    %v756 = vand.u32 %v755, 4294901760
    %757 = vmatpush.msra.mxu0 %v756
    %v758 = vand.u32 %v453, 4294901760
    %v759 = vsub.f32 %v453, %v758
    %v760 = vand.u32 %v759, 4294901760
    %761 = vmatpush.msra.mxu0 %v760
    %v762 = vand.u32 %v452, 4294901760
    %v763 = vsub.f32 %v452, %v762
    %v764 = vand.u32 %v763, 4294901760
    %765 = vmatpush.msra.mxu0 %v764
    %v766 = vand.u32 %v451, 4294901760
    %v767 = vsub.f32 %v451, %v766
    %v768 = vand.u32 %v767, 4294901760
    %769 = vmatpush.msra.mxu0 %v768
    %v770 = vand.u32 %v450, 4294901760
    %771 = vmatmul.f32.gmra.mxu0 %v770
    %v772 = vpop.f32.mrf.mxu0
    %v773 = vadd.f32 %v704, %v772
    %774 = vdwg.mxu0
    %v775 = vand.u32 %v466, 4294901760
    %776 = vmatpush.msra.mxu0 %v775
    %v777 = vand.u32 %v465, 4294901760
    %778 = vmatpush.msra.mxu0 %v777
    %v779 = vand.u32 %v464, 4294901760
    %780 = vmatpush.msra.mxu0 %v779
    %v781 = vand.u32 %v463, 4294901760
    %782 = vmatpush.msra.mxu0 %v781
    %v783 = vand.u32 %v462, 4294901760
    %784 = vmatpush.msra.mxu0 %v783
    %v785 = vand.u32 %v461, 4294901760
    %786 = vmatpush.msra.mxu0 %v785
    %v787 = vand.u32 %v460, 4294901760
    %788 = vmatpush.msra.mxu0 %v787
    %v789 = vand.u32 %v459, 4294901760
    %790 = vmatpush.msra.mxu0 %v789
    %v791 = vand.u32 %v458, 4294901760
    %792 = vmatpush.msra.mxu0 %v791
    %v793 = vand.u32 %v457, 4294901760
    %794 = vmatpush.msra.mxu0 %v793
    %v795 = vand.u32 %v456, 4294901760
    %796 = vmatpush.msra.mxu0 %v795
    %v797 = vand.u32 %v455, 4294901760
    %798 = vmatpush.msra.mxu0 %v797
    %v799 = vand.u32 %v454, 4294901760
    %800 = vmatpush.msra.mxu0 %v799
    %v801 = vand.u32 %v453, 4294901760
    %802 = vmatpush.msra.mxu0 %v801
    %v803 = vand.u32 %v452, 4294901760
    %804 = vmatpush.msra.mxu0 %v803
    %v805 = vand.u32 %v451, 4294901760
    %806 = vmatpush.msra.mxu0 %v805
    %v807 = vand.u32 %v450, 4294901760
    %808 = vmatmul.f32.gmra.mxu0 %v807
    %v809 = vpop.f32.mrf.mxu0
    %v810 = vadd.f32 %v773, %v809
    %811 = vdwg.mxu0
    %v812 = vmax.f32 %v810, 0.0
    %v813 = vld [vmem:[#allocation8] sm:$0xff]
    %v814 = vld [vmem:[#allocation8 + $0x8] sm:$0xff]
    %v815 = vld [vmem:[#allocation8 + $0x10] sm:$0xff]
    %v816 = vld [vmem:[#allocation8 + $0x18] sm:$0xff]
    %v817 = vld [vmem:[#allocation8 + $0x20] sm:$0xff]
    %v818 = vld [vmem:[#allocation8 + $0x28] sm:$0xff]
    %v819 = vld [vmem:[#allocation8 + $0x30] sm:$0xff]
    %v820 = vld [vmem:[#allocation8 + $0x38] sm:$0xff]
    %v821 = vld [vmem:[#allocation8 + $0x40] sm:$0xff]
    %v822 = vld [vmem:[#allocation8 + $0x48] sm:$0xff]
    %v823 = vld [vmem:[#allocation8 + $0x50] sm:$0xff]
    %v824 = vld [vmem:[#allocation8 + $0x58] sm:$0xff]
    %v825 = vld [vmem:[#allocation8 + $0x60] sm:$0xff]
    %v826 = vld [vmem:[#allocation8 + $0x68] sm:$0xff]
    %v827 = vld [vmem:[#allocation8 + $0x70] sm:$0xff]
    %v828 = vld [vmem:[#allocation8 + $0x78] sm:$0xff]
    %v829 = vld [vmem:[%s6] sm:$0x1]
    %v831 = vperm.slane %v829, 0
    %v833 = vand.u32 %v828, 4294901760
    %834 = vmatpush.msra.mxu0 %v833
    %v835 = vand.u32 %v827, 4294901760
    %836 = vmatpush.msra.mxu0 %v835
    %v837 = vand.u32 %v826, 4294901760
    %838 = vmatpush.msra.mxu0 %v837
    %v839 = vand.u32 %v825, 4294901760
    %840 = vmatpush.msra.mxu0 %v839
    %v841 = vand.u32 %v824, 4294901760
    %842 = vmatpush.msra.mxu0 %v841
    %v843 = vand.u32 %v823, 4294901760
    %844 = vmatpush.msra.mxu0 %v843
    %v845 = vand.u32 %v822, 4294901760
    %846 = vmatpush.msra.mxu0 %v845
    %v847 = vand.u32 %v821, 4294901760
    %848 = vmatpush.msra.mxu0 %v847
    %v849 = vand.u32 %v820, 4294901760
    %850 = vmatpush.msra.mxu0 %v849
    %v851 = vand.u32 %v819, 4294901760
    %852 = vmatpush.msra.mxu0 %v851
    %v853 = vand.u32 %v818, 4294901760
    %854 = vmatpush.msra.mxu0 %v853
    %v855 = vand.u32 %v817, 4294901760
    %856 = vmatpush.msra.mxu0 %v855
    %v857 = vand.u32 %v816, 4294901760
    %858 = vmatpush.msra.mxu0 %v857
    %v859 = vand.u32 %v815, 4294901760
    %860 = vmatpush.msra.mxu0 %v859
    %v861 = vand.u32 %v814, 4294901760
    %862 = vmatpush.msra.mxu0 %v861
    %v863 = vand.u32 %v813, 4294901760
    %864 = vmatpush.msra.mxu0 %v863
    %v865 = vand.u32 %v812, 4294901760
    %v866 = vsub.f32 %v812, %v865
    %v867 = vand.u32 %v866, 4294901760
    %v868 = vsub.f32 %v866, %v867
    %v869 = vand.u32 %v868, 4294901760
    %870 = vmatmul.f32.gmra.mxu0 %v869
    %v871 = vpop.f32.mrf.mxu0
    %v872 = vadd.f32 %v831, %v871
    %873 = vdwg.mxu0
    %v874 = vand.u32 %v828, 4294901760
    %v875 = vsub.f32 %v828, %v874
    %v876 = vand.u32 %v875, 4294901760
    %v877 = vsub.f32 %v875, %v876
    %v878 = vand.u32 %v877, 4294901760
    %879 = vmatpush.msra.mxu0 %v878
    %v880 = vand.u32 %v827, 4294901760
    %v881 = vsub.f32 %v827, %v880
    %v882 = vand.u32 %v881, 4294901760
    %v883 = vsub.f32 %v881, %v882
    %v884 = vand.u32 %v883, 4294901760
    %885 = vmatpush.msra.mxu0 %v884
    %v886 = vand.u32 %v826, 4294901760
    %v887 = vsub.f32 %v826, %v886
    %v888 = vand.u32 %v887, 4294901760
    %v889 = vsub.f32 %v887, %v888
    %v890 = vand.u32 %v889, 4294901760
    %891 = vmatpush.msra.mxu0 %v890
    %v892 = vand.u32 %v825, 4294901760
    %v893 = vsub.f32 %v825, %v892
    %v894 = vand.u32 %v893, 4294901760
    %v895 = vsub.f32 %v893, %v894
    %v896 = vand.u32 %v895, 4294901760
    %897 = vmatpush.msra.mxu0 %v896
    %v898 = vand.u32 %v824, 4294901760
    %v899 = vsub.f32 %v824, %v898
    %v900 = vand.u32 %v899, 4294901760
    %v901 = vsub.f32 %v899, %v900
    %v902 = vand.u32 %v901, 4294901760
    %903 = vmatpush.msra.mxu0 %v902
    %v904 = vand.u32 %v823, 4294901760
    %v905 = vsub.f32 %v823, %v904
    %v906 = vand.u32 %v905, 4294901760
    %v907 = vsub.f32 %v905, %v906
    %v908 = vand.u32 %v907, 4294901760
    %909 = vmatpush.msra.mxu0 %v908
    %v910 = vand.u32 %v822, 4294901760
    %v911 = vsub.f32 %v822, %v910
    %v912 = vand.u32 %v911, 4294901760
    %v913 = vsub.f32 %v911, %v912
    %v914 = vand.u32 %v913, 4294901760
    %915 = vmatpush.msra.mxu0 %v914
    %v916 = vand.u32 %v821, 4294901760
    %v917 = vsub.f32 %v821, %v916
    %v918 = vand.u32 %v917, 4294901760
    %v919 = vsub.f32 %v917, %v918
    %v920 = vand.u32 %v919, 4294901760
    %921 = vmatpush.msra.mxu0 %v920
    %v922 = vand.u32 %v820, 4294901760
    %v923 = vsub.f32 %v820, %v922
    %v924 = vand.u32 %v923, 4294901760
    %v925 = vsub.f32 %v923, %v924
    %v926 = vand.u32 %v925, 4294901760
    %927 = vmatpush.msra.mxu0 %v926
    %v928 = vand.u32 %v819, 4294901760
    %v929 = vsub.f32 %v819, %v928
    %v930 = vand.u32 %v929, 4294901760
    %v931 = vsub.f32 %v929, %v930
    %v932 = vand.u32 %v931, 4294901760
    %933 = vmatpush.msra.mxu0 %v932
    %v934 = vand.u32 %v818, 4294901760
    %v935 = vsub.f32 %v818, %v934
    %v936 = vand.u32 %v935, 4294901760
    %v937 = vsub.f32 %v935, %v936
    %v938 = vand.u32 %v937, 4294901760
    %939 = vmatpush.msra.mxu0 %v938
    %v940 = vand.u32 %v817, 4294901760
    %v941 = vsub.f32 %v817, %v940
    %v942 = vand.u32 %v941, 4294901760
    %v943 = vsub.f32 %v941, %v942
    %v944 = vand.u32 %v943, 4294901760
    %945 = vmatpush.msra.mxu0 %v944
    %v946 = vand.u32 %v816, 4294901760
    %v947 = vsub.f32 %v816, %v946
    %v948 = vand.u32 %v947, 4294901760
    %v949 = vsub.f32 %v947, %v948
    %v950 = vand.u32 %v949, 4294901760
    %951 = vmatpush.msra.mxu0 %v950
    %v952 = vand.u32 %v815, 4294901760
    %v953 = vsub.f32 %v815, %v952
    %v954 = vand.u32 %v953, 4294901760
    %v955 = vsub.f32 %v953, %v954
    %v956 = vand.u32 %v955, 4294901760
    %957 = vmatpush.msra.mxu0 %v956
    %v958 = vand.u32 %v814, 4294901760
    %v959 = vsub.f32 %v814, %v958
    %v960 = vand.u32 %v959, 4294901760
    %v961 = vsub.f32 %v959, %v960
    %v962 = vand.u32 %v961, 4294901760
    %963 = vmatpush.msra.mxu0 %v962
    %v964 = vand.u32 %v813, 4294901760
    %v965 = vsub.f32 %v813, %v964
    %v966 = vand.u32 %v965, 4294901760
    %v967 = vsub.f32 %v965, %v966
    %v968 = vand.u32 %v967, 4294901760
    %969 = vmatpush.msra.mxu0 %v968
    %v970 = vand.u32 %v812, 4294901760
    %971 = vmatmul.f32.gmra.mxu0 %v970
    %v972 = vpop.f32.mrf.mxu0
    %v973 = vadd.f32 %v872, %v972
    %974 = vdwg.mxu0
    %v975 = vand.u32 %v828, 4294901760
    %v976 = vsub.f32 %v828, %v975
    %977 = vmatpush.msra.mxu0 %v976
    %v978 = vand.u32 %v827, 4294901760
    %v979 = vsub.f32 %v827, %v978
    %980 = vmatpush.msra.mxu0 %v979
    %v981 = vand.u32 %v826, 4294901760
    %v982 = vsub.f32 %v826, %v981
    %983 = vmatpush.msra.mxu0 %v982
    %v984 = vand.u32 %v825, 4294901760
    %v985 = vsub.f32 %v825, %v984
    %986 = vmatpush.msra.mxu0 %v985
    %v987 = vand.u32 %v824, 4294901760
    %v988 = vsub.f32 %v824, %v987
    %989 = vmatpush.msra.mxu0 %v988
    %v990 = vand.u32 %v823, 4294901760
    %v991 = vsub.f32 %v823, %v990
    %992 = vmatpush.msra.mxu0 %v991
    %v993 = vand.u32 %v822, 4294901760
    %v994 = vsub.f32 %v822, %v993
    %995 = vmatpush.msra.mxu0 %v994
    %v996 = vand.u32 %v821, 4294901760
    %v997 = vsub.f32 %v821, %v996
    %998 = vmatpush.msra.mxu0 %v997
    %v999 = vand.u32 %v820, 4294901760
    %v1000 = vsub.f32 %v820, %v999
    %1001 = vmatpush.msra.mxu0 %v1000
    %v1002 = vand.u32 %v819, 4294901760
    %v1003 = vsub.f32 %v819, %v1002
    %1004 = vmatpush.msra.mxu0 %v1003
    %v1005 = vand.u32 %v818, 4294901760
    %v1006 = vsub.f32 %v818, %v1005
    %1007 = vmatpush.msra.mxu0 %v1006
    %v1008 = vand.u32 %v817, 4294901760
    %v1009 = vsub.f32 %v817, %v1008
    %1010 = vmatpush.msra.mxu0 %v1009
    %v1011 = vand.u32 %v816, 4294901760
    %v1012 = vsub.f32 %v816, %v1011
    %1013 = vmatpush.msra.mxu0 %v1012
    %v1014 = vand.u32 %v815, 4294901760
    %v1015 = vsub.f32 %v815, %v1014
    %1016 = vmatpush.msra.mxu0 %v1015
    %v1017 = vand.u32 %v814, 4294901760
    %v1018 = vsub.f32 %v814, %v1017
    %1019 = vmatpush.msra.mxu0 %v1018
    %v1020 = vand.u32 %v813, 4294901760
    %v1021 = vsub.f32 %v813, %v1020
    %1022 = vmatpush.msra.mxu0 %v1021
    %v1023 = vand.u32 %v812, 4294901760
    %v1024 = vsub.f32 %v812, %v1023
    %1025 = vmatmul.f32.gmra.mxu0 %v1024
    %v1026 = vpop.f32.mrf.mxu0
    %v1027 = vadd.f32 %v973, %v1026
    %1028 = vdwg.mxu0
    %v1029 = vand.u32 %v828, 4294901760
    %1030 = vmatpush.msra.mxu0 %v1029
    %v1031 = vand.u32 %v827, 4294901760
    %1032 = vmatpush.msra.mxu0 %v1031
    %v1033 = vand.u32 %v826, 4294901760
    %1034 = vmatpush.msra.mxu0 %v1033
    %v1035 = vand.u32 %v825, 4294901760
    %1036 = vmatpush.msra.mxu0 %v1035
    %v1037 = vand.u32 %v824, 4294901760
    %1038 = vmatpush.msra.mxu0 %v1037
    %v1039 = vand.u32 %v823, 4294901760
    %1040 = vmatpush.msra.mxu0 %v1039
    %v1041 = vand.u32 %v822, 4294901760
    %1042 = vmatpush.msra.mxu0 %v1041
    %v1043 = vand.u32 %v821, 4294901760
    %1044 = vmatpush.msra.mxu0 %v1043
    %v1045 = vand.u32 %v820, 4294901760
    %1046 = vmatpush.msra.mxu0 %v1045
    %v1047 = vand.u32 %v819, 4294901760
    %1048 = vmatpush.msra.mxu0 %v1047
    %v1049 = vand.u32 %v818, 4294901760
    %1050 = vmatpush.msra.mxu0 %v1049
    %v1051 = vand.u32 %v817, 4294901760
    %1052 = vmatpush.msra.mxu0 %v1051
    %v1053 = vand.u32 %v816, 4294901760
    %1054 = vmatpush.msra.mxu0 %v1053
    %v1055 = vand.u32 %v815, 4294901760
    %1056 = vmatpush.msra.mxu0 %v1055
    %v1057 = vand.u32 %v814, 4294901760
    %1058 = vmatpush.msra.mxu0 %v1057
    %v1059 = vand.u32 %v813, 4294901760
    %1060 = vmatpush.msra.mxu0 %v1059
    %v1061 = vand.u32 %v812, 4294901760
    %v1062 = vsub.f32 %v812, %v1061
    %v1063 = vand.u32 %v1062, 4294901760
    %1064 = vmatmul.f32.gmra.mxu0 %v1063
    %v1065 = vpop.f32.mrf.mxu0
    %v1066 = vadd.f32 %v1027, %v1065
    %1067 = vdwg.mxu0
    %v1068 = vand.u32 %v828, 4294901760
    %v1069 = vsub.f32 %v828, %v1068
    %v1070 = vand.u32 %v1069, 4294901760
    %1071 = vmatpush.msra.mxu0 %v1070
    %v1072 = vand.u32 %v827, 4294901760
    %v1073 = vsub.f32 %v827, %v1072
    %v1074 = vand.u32 %v1073, 4294901760
    %1075 = vmatpush.msra.mxu0 %v1074
    %v1076 = vand.u32 %v826, 4294901760
    %v1077 = vsub.f32 %v826, %v1076
    %v1078 = vand.u32 %v1077, 4294901760
    %1079 = vmatpush.msra.mxu0 %v1078
    %v1080 = vand.u32 %v825, 4294901760
    %v1081 = vsub.f32 %v825, %v1080
    %v1082 = vand.u32 %v1081, 4294901760
    %1083 = vmatpush.msra.mxu0 %v1082
    %v1084 = vand.u32 %v824, 4294901760
    %v1085 = vsub.f32 %v824, %v1084
    %v1086 = vand.u32 %v1085, 4294901760
    %1087 = vmatpush.msra.mxu0 %v1086
    %v1088 = vand.u32 %v823, 4294901760
    %v1089 = vsub.f32 %v823, %v1088
    %v1090 = vand.u32 %v1089, 4294901760
    %1091 = vmatpush.msra.mxu0 %v1090
    %v1092 = vand.u32 %v822, 4294901760
    %v1093 = vsub.f32 %v822, %v1092
    %v1094 = vand.u32 %v1093, 4294901760
    %1095 = vmatpush.msra.mxu0 %v1094
    %v1096 = vand.u32 %v821, 4294901760
    %v1097 = vsub.f32 %v821, %v1096
    %v1098 = vand.u32 %v1097, 4294901760
    %1099 = vmatpush.msra.mxu0 %v1098
    %v1100 = vand.u32 %v820, 4294901760
    %v1101 = vsub.f32 %v820, %v1100
    %v1102 = vand.u32 %v1101, 4294901760
    %1103 = vmatpush.msra.mxu0 %v1102
    %v1104 = vand.u32 %v819, 4294901760
    %v1105 = vsub.f32 %v819, %v1104
    %v1106 = vand.u32 %v1105, 4294901760
    %1107 = vmatpush.msra.mxu0 %v1106
    %v1108 = vand.u32 %v818, 4294901760
    %v1109 = vsub.f32 %v818, %v1108
    %v1110 = vand.u32 %v1109, 4294901760
    %1111 = vmatpush.msra.mxu0 %v1110
    %v1112 = vand.u32 %v817, 4294901760
    %v1113 = vsub.f32 %v817, %v1112
    %v1114 = vand.u32 %v1113, 4294901760
    %1115 = vmatpush.msra.mxu0 %v1114
    %v1116 = vand.u32 %v816, 4294901760
    %v1117 = vsub.f32 %v816, %v1116
    %v1118 = vand.u32 %v1117, 4294901760
    %1119 = vmatpush.msra.mxu0 %v1118
    %v1120 = vand.u32 %v815, 4294901760
    %v1121 = vsub.f32 %v815, %v1120
    %v1122 = vand.u32 %v1121, 4294901760
    %1123 = vmatpush.msra.mxu0 %v1122
    %v1124 = vand.u32 %v814, 4294901760
    %v1125 = vsub.f32 %v814, %v1124
    %v1126 = vand.u32 %v1125, 4294901760
    %1127 = vmatpush.msra.mxu0 %v1126
    %v1128 = vand.u32 %v813, 4294901760
    %v1129 = vsub.f32 %v813, %v1128
    %v1130 = vand.u32 %v1129, 4294901760
    %1131 = vmatpush.msra.mxu0 %v1130
    %v1132 = vand.u32 %v812, 4294901760
    %1133 = vmatmul.f32.gmra.mxu0 %v1132
    %v1134 = vpop.f32.mrf.mxu0
    %v1135 = vadd.f32 %v1066, %v1134
    %1136 = vdwg.mxu0
    %v1137 = vand.u32 %v828, 4294901760
    %1138 = vmatpush.msra.mxu0 %v1137
    %v1139 = vand.u32 %v827, 4294901760
    %1140 = vmatpush.msra.mxu0 %v1139
    %v1141 = vand.u32 %v826, 4294901760
    %1142 = vmatpush.msra.mxu0 %v1141
    %v1143 = vand.u32 %v825, 4294901760
    %1144 = vmatpush.msra.mxu0 %v1143
    %v1145 = vand.u32 %v824, 4294901760
    %1146 = vmatpush.msra.mxu0 %v1145
    %v1147 = vand.u32 %v823, 4294901760
    %1148 = vmatpush.msra.mxu0 %v1147
    %v1149 = vand.u32 %v822, 4294901760
    %1150 = vmatpush.msra.mxu0 %v1149
    %v1151 = vand.u32 %v821, 4294901760
    %1152 = vmatpush.msra.mxu0 %v1151
    %v1153 = vand.u32 %v820, 4294901760
    %1154 = vmatpush.msra.mxu0 %v1153
    %v1155 = vand.u32 %v819, 4294901760
    %1156 = vmatpush.msra.mxu0 %v1155
    %v1157 = vand.u32 %v818, 4294901760
    %1158 = vmatpush.msra.mxu0 %v1157
    %v1159 = vand.u32 %v817, 4294901760
    %1160 = vmatpush.msra.mxu0 %v1159
    %v1161 = vand.u32 %v816, 4294901760
    %1162 = vmatpush.msra.mxu0 %v1161
    %v1163 = vand.u32 %v815, 4294901760
    %1164 = vmatpush.msra.mxu0 %v1163
    %v1165 = vand.u32 %v814, 4294901760
    %1166 = vmatpush.msra.mxu0 %v1165
    %v1167 = vand.u32 %v813, 4294901760
    %1168 = vmatpush.msra.mxu0 %v1167
    %v1169 = vand.u32 %v812, 4294901760
    %1170 = vmatmul.f32.gmra.mxu0 %v1169
    %v1171 = vpop.f32.mrf.mxu0
    %v1172 = vadd.f32 %v1135, %v1171
    %1173 = vdwg.mxu0
    %v1174 = vtanh.pop %v1172
    %1175 = vst [vmem:[#allocation10] sm:$0xff] %v1174
    // Predicated region
    $region46: #{tpu_custom_call.1} parent=1 // pred_check
      _
    $region47: #{tpu_custom_call.1} parent=1 // pred_check_branch
      %1177 = sbr.rel (0) target = $region49
    $region48: #{tpu_custom_call.1} parent=1 // pred_region
      %1179 = vsyncadd [#allocation4], 0
      %s1181 = sshll.u32 [#allocation10], 4
      %s1182 = int_to_ptr.vmem [resolvable:$true] %s1181
      %s1183 = sshll.u32 %s7, 4
      %s1184 = int_to_ptr.hbm [resolvable:$true] %s1183
      %1186 = dma.vmem_to_hbm [thread:$0]  %s1182, 128, %s1184, [#allocation4]
    $region49: #{tpu_custom_call.1} parent=1 // pred_fallthru
      _
    // Predicated region
    $region50: #{tpu_custom_call.1} parent=1 // pred_check
      _
    $region51: #{tpu_custom_call.1} parent=1 // pred_check_branch
      %1188 = sbr.rel (0) target = $region53
    $region52: #{tpu_custom_call.1} parent=1 // pred_region
      %1190 = dma.done [#allocation4], 128
    $region53: #{tpu_custom_call.1} parent=1 // pred_fallthru
      _
    %1191 = vsyncpa [#allocation3], 1
    %1192 = vsyncpa [#allocation6], 1
    %1193 = vsyncpa [#allocation9], 1
    %1194 = vsyncpa [#allocation4], 1

// kernel: tpu_custom_call.1
$region0: #{tpu_custom_call.1}
  #allocation0 [shape = 'u32[]', space=smem, size = 0x4, offset = 0x4, fixed_abs, tag = 'smem constant byte address 0x4 - core index']
  #allocation1 [shape = 'u32[72,128]{1,0:T(1,128)}', space=vmem, size = 0x9000, scoped, tag = 'internal scratch']
  %s0 = inlined_call_operand.hbm [shape: f32[8,128], index: 0, kind: input, shape index: {}]
  %s1 = inlined_call_operand.hbm [shape: f32[128,128], index: 1, kind: input, shape index: {}]
  %s2 = inlined_call_operand.vmem [shape: f32[1,128], index: 2, kind: input, shape index: {}]
  %s3 = inlined_call_operand.hbm [shape: f32[128,128], index: 3, kind: input, shape index: {}]
  %s4 = inlined_call_operand.vmem [shape: f32[1,128], index: 4, kind: input, shape index: {}]
  %s5 = inlined_call_operand.hbm [shape: f32[128,128], index: 5, kind: input, shape index: {}]
  %s6 = inlined_call_operand.vmem [shape: f32[1,128], index: 6, kind: input, shape index: {}]
  %s7 = inlined_call_operand.hbm [shape: f32[8,128], index: 7, kind: output, shape index: {}]
  %s8 = sld [smem:[#allocation0]]
  $region54: #{tpu_custom_call.1} parent=0
    _
  %s10 = ssub.s32 1, %s8
  %s11 = scalar_select 0, %s10, %s8
  $region1: #{tpu_custom_call.1} parent=0
    #allocation2 [shape = 'u8[4096]{0}', space=vmem, size = 0x1000, scoped, tag = 'input window, operand 0, single buffered']
    #allocation3 [shape = 's32[1]{0}', space=sflag, size = 0x4, scoped, tag = 'scoped memory for tpu_custom_call.1']
    #allocation4 [shape = 's32[1]{0}', space=sflag, size = 0x4, scoped, tag = 'scoped memory for tpu_custom_call.1']
    #allocation5 [shape = 'u8[65536]{0}', space=vmem, size = 0x10000, scoped, tag = 'input window, operand 1, single buffered']
    #allocation6 [shape = 's32[1]{0}', space=sflag, size = 0x4, scoped, tag = 'scoped memory for tpu_custom_call.1']
    #allocation7 [shape = 'u8[65536]{0}', space=vmem, size = 0x10000, scoped, tag = 'input window, operand 3, single buffered']
    #allocation8 [shape = 'u8[65536]{0}', space=vmem, size = 0x10000, scoped, tag = 'input window, operand 5, single buffered']
    #allocation9 [shape = 's32[1]{0}', space=sflag, size = 0x4, scoped, tag = 'scoped memory for tpu_custom_call.1']
    #allocation10 [shape = 'u8[4096]{0}', space=vmem, size = 0x1000, scoped, tag = 'output window, operand 0, single buffered']
    %12 = vsyncpa [#allocation3], 0
    %13 = vsyncpa [#allocation6], 0
    %14 = vsyncpa [#allocation9], 0
    %15 = vsyncpa [#allocation4], 0
    // Predicated region
    $region2: #{tpu_custom_call.1} parent=1 // pred_check
      _
    $region3: #{tpu_custom_call.1} parent=1 // pred_check_branch
      %17 = sbr.rel (0) target = $region5
    $region4: #{tpu_custom_call.1} parent=1 // pred_region
      %19 = vsyncadd [#allocation3], 0
      %s21 = sshll.u32 %s0, 4
      %s22 = int_to_ptr.hbm [resolvable:$true] %s21
      %s23 = sshll.u32 [#allocation2], 4
      %s24 = int_to_ptr.vmem [resolvable:$true] %s23
      %26 = dma.hbm_to_vmem [thread:$0]  %s22, 128, %s24, [#allocation3]
    $region5: #{tpu_custom_call.1} parent=1 // pred_fallthru
      _
    // Predicated region
    $region6: #{tpu_custom_call.1} parent=1 // pred_check
      _
    $region7: #{tpu_custom_call.1} parent=1 // pred_check_branch
      %28 = sbr.rel (0) target = $region9
    $region8: #{tpu_custom_call.1} parent=1 // pred_region
      %30 = vsyncadd [#allocation6], 0
      %s31 = sshll.u32 %s1, 4
      %s32 = int_to_ptr.hbm [resolvable:$true] %s31
      %s33 = sshll.u32 [#allocation5], 4
      %s34 = int_to_ptr.vmem [resolvable:$true] %s33
      %39 = dma.hbm_to_vmem [thread:$0]  %s32, 2048, %s34, [#allocation6], 128, 128, 8
    $region9: #{tpu_custom_call.1} parent=1 // pred_fallthru
      _
    // Predicated region
    $region10: #{tpu_custom_call.1} parent=1 // pred_check
      _
    $region11: #{tpu_custom_call.1} parent=1 // pred_check_branch
      %41 = sbr.rel (0) target = $region13
    $region12: #{tpu_custom_call.1} parent=1 // pred_region
      _
    $region13: #{tpu_custom_call.1} parent=1 // pred_fallthru
      _
    // Predicated region
    $region14: #{tpu_custom_call.1} parent=1 // pred_check
      _
    $region15: #{tpu_custom_call.1} parent=1 // pred_check_branch
      %43 = sbr.rel (0) target = $region17
    $region16: #{tpu_custom_call.1} parent=1 // pred_region
      %45 = vsyncadd [#allocation6], 0
      %s46 = sshll.u32 %s3, 4
      %s47 = int_to_ptr.hbm [resolvable:$true] %s46
      %s48 = sshll.u32 [#allocation7], 4
      %s49 = int_to_ptr.vmem [resolvable:$true] %s48
      %54 = dma.hbm_to_vmem [thread:$0]  %s47, 2048, %s49, [#allocation6], 128, 128, 8
    $region17: #{tpu_custom_call.1} parent=1 // pred_fallthru
      _
    // Predicated region
    $region18: #{tpu_custom_call.1} parent=1 // pred_check
      _
    $region19: #{tpu_custom_call.1} parent=1 // pred_check_branch
      %56 = sbr.rel (0) target = $region21
    $region20: #{tpu_custom_call.1} parent=1 // pred_region
      _
    $region21: #{tpu_custom_call.1} parent=1 // pred_fallthru
      _
    // Predicated region
    $region22: #{tpu_custom_call.1} parent=1 // pred_check
      _
    $region23: #{tpu_custom_call.1} parent=1 // pred_check_branch
      %58 = sbr.rel (0) target = $region25
    $region24: #{tpu_custom_call.1} parent=1 // pred_region
      %60 = vsyncadd [#allocation9], 0
      %s61 = sshll.u32 %s5, 4
      %s62 = int_to_ptr.hbm [resolvable:$true] %s61
      %s63 = sshll.u32 [#allocation8], 4
      %s64 = int_to_ptr.vmem [resolvable:$true] %s63
      %69 = dma.hbm_to_vmem [thread:$0]  %s62, 2048, %s64, [#allocation9], 128, 128, 8
    $region25: #{tpu_custom_call.1} parent=1 // pred_fallthru
      _
    // Predicated region
    $region26: #{tpu_custom_call.1} parent=1 // pred_check
      _
    $region27: #{tpu_custom_call.1} parent=1 // pred_check_branch
      %71 = sbr.rel (0) target = $region29
    $region28: #{tpu_custom_call.1} parent=1 // pred_region
      _
    $region29: #{tpu_custom_call.1} parent=1 // pred_fallthru
      _
    // Predicated region
    $region30: #{tpu_custom_call.1} parent=1 // pred_check
      _
    $region31: #{tpu_custom_call.1} parent=1 // pred_check_branch
      %73 = sbr.rel (0) target = $region33
    $region32: #{tpu_custom_call.1} parent=1 // pred_region
      %75 = dma.done [#allocation3], 128
    $region33: #{tpu_custom_call.1} parent=1 // pred_fallthru
      _
    // Predicated region
    $region34: #{tpu_custom_call.1} parent=1 // pred_check
      _
    $region35: #{tpu_custom_call.1} parent=1 // pred_check_branch
      %77 = sbr.rel (0) target = $region37
    $region36: #{tpu_custom_call.1} parent=1 // pred_region
      %79 = dma.done [#allocation6], 2048
    $region37: #{tpu_custom_call.1} parent=1 // pred_fallthru
      _
    // Predicated region
    $region38: #{tpu_custom_call.1} parent=1 // pred_check
      _
    $region39: #{tpu_custom_call.1} parent=1 // pred_check_branch
      %81 = sbr.rel (0) target = $region41
    $region40: #{tpu_custom_call.1} parent=1 // pred_region
      %83 = dma.done [#allocation6], 2048
    $region41: #{tpu_custom_call.1} parent=1 // pred_fallthru
      _
    // Predicated region
    $region42: #{tpu_custom_call.1} parent=1 // pred_check
      _
    $region43: #{tpu_custom_call.1} parent=1 // pred_check_branch
      %85 = sbr.rel (0) target = $region45
    $region44: #{tpu_custom_call.1} parent=1 // pred_region
      %87 = dma.done [#allocation9], 2048
    $region45: #{tpu_custom_call.1} parent=1 // pred_fallthru
      _
    %v88 = vld [vmem:[#allocation2] sm:$0xff]
    %v89 = vld [vmem:[#allocation5] sm:$0xff]
    %v90 = vld [vmem:[#allocation5 + $0x8] sm:$0xff]
    %v91 = vld [vmem:[#allocation5 + $0x10] sm:$0xff]
    %v92 = vld [vmem:[#allocation5 + $0x18] sm:$0xff]
    %v93 = vld [vmem:[#allocation5 + $0x20] sm:$0xff]
    %v94 = vld [vmem:[#allocation5 + $0x28] sm:$0xff]
    %v95 = vld [vmem:[#allocation5 + $0x30] sm:$0xff]
    %v96 = vld [vmem:[#allocation5 + $0x38] sm:$0xff]
    %v97 = vld [vmem:[#allocation5 + $0x40] sm:$0xff]
    %v98 = vld [vmem:[#allocation5 + $0x48] sm:$0xff]
    %v99 = vld [vmem:[#allocation5 + $0x50] sm:$0xff]
    %v100 = vld [vmem:[#allocation5 + $0x58] sm:$0xff]
    %v101 = vld [vmem:[#allocation5 + $0x60] sm:$0xff]
    %v102 = vld [vmem:[#allocation5 + $0x68] sm:$0xff]
    %v103 = vld [vmem:[#allocation5 + $0x70] sm:$0xff]
    %v104 = vld [vmem:[#allocation5 + $0x78] sm:$0xff]
    %v105 = vld [vmem:[%s2] sm:$0x1]
    %v107 = vperm.slane %v105, 0
    %v109 = vand.u32 %v104, 4294901760
    %110 = vmatpush.msra.mxu0 %v109
    %v111 = vand.u32 %v103, 4294901760
    %112 = vmatpush.msra.mxu0 %v111
    %v113 = vand.u32 %v102, 4294901760
    %114 = vmatpush.msra.mxu0 %v113
    %v115 = vand.u32 %v101, 4294901760
    %116 = vmatpush.msra.mxu0 %v115
    %v117 = vand.u32 %v100, 4294901760
    %118 = vmatpush.msra.mxu0 %v117
    %v119 = vand.u32 %v99, 4294901760
    %120 = vmatpush.msra.mxu0 %v119
    %v121 = vand.u32 %v98, 4294901760
    %122 = vmatpush.msra.mxu0 %v121
    %v123 = vand.u32 %v97, 4294901760
    %124 = vmatpush.msra.mxu0 %v123
    %v125 = vand.u32 %v96, 4294901760
    %126 = vmatpush.msra.mxu0 %v125
    %v127 = vand.u32 %v95, 4294901760
    %128 = vmatpush.msra.mxu0 %v127
    %v129 = vand.u32 %v94, 4294901760
    %130 = vmatpush.msra.mxu0 %v129
    %v131 = vand.u32 %v93, 4294901760
    %132 = vmatpush.msra.mxu0 %v131
    %v133 = vand.u32 %v92, 4294901760
    %134 = vmatpush.msra.mxu0 %v133
    %v135 = vand.u32 %v91, 4294901760
    %136 = vmatpush.msra.mxu0 %v135
    %v137 = vand.u32 %v90, 4294901760
    %138 = vmatpush.msra.mxu0 %v137
    %v139 = vand.u32 %v89, 4294901760
    %140 = vmatpush.msra.mxu0 %v139
    %v141 = vand.u32 %v88, 4294901760
    %v142 = vsub.f32 %v88, %v141
    %v143 = vand.u32 %v142, 4294901760
    %v144 = vsub.f32 %v142, %v143
    %v145 = vand.u32 %v144, 4294901760
    %146 = vmatmul.f32.gmra.mxu0 %v145
    %v147 = vpop.f32.mrf.mxu0
    %v148 = vadd.f32 %v107, %v147
    %149 = vdwg.mxu0
    %v150 = vand.u32 %v104, 4294901760
    %v151 = vsub.f32 %v104, %v150
    %v152 = vand.u32 %v151, 4294901760
    %v153 = vsub.f32 %v151, %v152
    %v154 = vand.u32 %v153, 4294901760
    %155 = vmatpush.msra.mxu0 %v154
    %v156 = vand.u32 %v103, 4294901760
    %v157 = vsub.f32 %v103, %v156
    %v158 = vand.u32 %v157, 4294901760
    %v159 = vsub.f32 %v157, %v158
    %v160 = vand.u32 %v159, 4294901760
    %161 = vmatpush.msra.mxu0 %v160
    %v162 = vand.u32 %v102, 4294901760
    %v163 = vsub.f32 %v102, %v162
    %v164 = vand.u32 %v163, 4294901760
    %v165 = vsub.f32 %v163, %v164
    %v166 = vand.u32 %v165, 4294901760
    %167 = vmatpush.msra.mxu0 %v166
    %v168 = vand.u32 %v101, 4294901760
    %v169 = vsub.f32 %v101, %v168
    %v170 = vand.u32 %v169, 4294901760
    %v171 = vsub.f32 %v169, %v170
    %v172 = vand.u32 %v171, 4294901760
    %173 = vmatpush.msra.mxu0 %v172
    %v174 = vand.u32 %v100, 4294901760
    %v175 = vsub.f32 %v100, %v174
    %v176 = vand.u32 %v175, 4294901760
    %v177 = vsub.f32 %v175, %v176
    %v178 = vand.u32 %v177, 4294901760
    %179 = vmatpush.msra.mxu0 %v178
    %v180 = vand.u32 %v99, 4294901760
    %v181 = vsub.f32 %v99, %v180
    %v182 = vand.u32 %v181, 4294901760
    %v183 = vsub.f32 %v181, %v182
    %v184 = vand.u32 %v183, 4294901760
    %185 = vmatpush.msra.mxu0 %v184
    %v186 = vand.u32 %v98, 4294901760
    %v187 = vsub.f32 %v98, %v186
    %v188 = vand.u32 %v187, 4294901760
    %v189 = vsub.f32 %v187, %v188
    %v190 = vand.u32 %v189, 4294901760
    %191 = vmatpush.msra.mxu0 %v190
    %v192 = vand.u32 %v97, 4294901760
    %v193 = vsub.f32 %v97, %v192
    %v194 = vand.u32 %v193, 4294901760
    %v195 = vsub.f32 %v193, %v194
    %v196 = vand.u32 %v195, 4294901760
    %197 = vmatpush.msra.mxu0 %v196
    %v198 = vand.u32 %v96, 4294901760
    %v199 = vsub.f32 %v96, %v198
    %v200 = vand.u32 %v199, 4294901760
    %v201 = vsub.f32 %v199, %v200
    %v202 = vand.u32 %v201, 4294901760
    %203 = vmatpush.msra.mxu0 %v202
    %v204 = vand.u32 %v95, 4294901760
    %v205 = vsub.f32 %v95, %v204
    %v206 = vand.u32 %v205, 4294901760
    %v207 = vsub.f32 %v205, %v206
    %v208 = vand.u32 %v207, 4294901760
    %209 = vmatpush.msra.mxu0 %v208
    %v210 = vand.u32 %v94, 4294901760
    %v211 = vsub.f32 %v94, %v210
    %v212 = vand.u32 %v211, 4294901760
    %v213 = vsub.f32 %v211, %v212
    %v214 = vand.u32 %v213, 4294901760
    %215 = vmatpush.msra.mxu0 %v214
    %v216 = vand.u32 %v93, 4294901760
    %v217 = vsub.f32 %v93, %v216
    %v218 = vand.u32 %v217, 4294901760
    %v219 = vsub.f32 %v217, %v218
    %v220 = vand.u32 %v219, 4294901760
    %221 = vmatpush.msra.mxu0 %v220
    %v222 = vand.u32 %v92, 4294901760
    %v223 = vsub.f32 %v92, %v222
    %v224 = vand.u32 %v223, 4294901760
    %v225 = vsub.f32 %v223, %v224
    %v226 = vand.u32 %v225, 4294901760
    %227 = vmatpush.msra.mxu0 %v226
    %v228 = vand.u32 %v91, 4294901760
    %v229 = vsub.f32 %v91, %v228
    %v230 = vand.u32 %v229, 4294901760
    %v231 = vsub.f32 %v229, %v230
    %v232 = vand.u32 %v231, 4294901760
    %233 = vmatpush.msra.mxu0 %v232
    %v234 = vand.u32 %v90, 4294901760
    %v235 = vsub.f32 %v90, %v234
    %v236 = vand.u32 %v235, 4294901760
    %v237 = vsub.f32 %v235, %v236
    %v238 = vand.u32 %v237, 4294901760
    %239 = vmatpush.msra.mxu0 %v238
    %v240 = vand.u32 %v89, 4294901760
    %v241 = vsub.f32 %v89, %v240
    %v242 = vand.u32 %v241, 4294901760
    %v243 = vsub.f32 %v241, %v242
    %v244 = vand.u32 %v243, 4294901760
    %245 = vmatpush.msra.mxu0 %v244
    %v246 = vand.u32 %v88, 4294901760
    %247 = vmatmul.f32.gmra.mxu0 %v246
    %v248 = vpop.f32.mrf.mxu0
    %v249 = vadd.f32 %v148, %v248
    %250 = vdwg.mxu0
    %v251 = vand.u32 %v104, 4294901760
    %v252 = vsub.f32 %v104, %v251
    %253 = vmatpush.msra.mxu0 %v252
    %v254 = vand.u32 %v103, 4294901760
    %v255 = vsub.f32 %v103, %v254
    %256 = vmatpush.msra.mxu0 %v255
    %v257 = vand.u32 %v102, 4294901760
    %v258 = vsub.f32 %v102, %v257
    %259 = vmatpush.msra.mxu0 %v258
    %v260 = vand.u32 %v101, 4294901760
    %v261 = vsub.f32 %v101, %v260
    %262 = vmatpush.msra.mxu0 %v261
    %v263 = vand.u32 %v100, 4294901760
    %v264 = vsub.f32 %v100, %v263
    %265 = vmatpush.msra.mxu0 %v264
    %v266 = vand.u32 %v99, 4294901760
    %v267 = vsub.f32 %v99, %v266
    %268 = vmatpush.msra.mxu0 %v267
    %v269 = vand.u32 %v98, 4294901760
    %v270 = vsub.f32 %v98, %v269
    %271 = vmatpush.msra.mxu0 %v270
    %v272 = vand.u32 %v97, 4294901760
    %v273 = vsub.f32 %v97, %v272
    %274 = vmatpush.msra.mxu0 %v273
    %v275 = vand.u32 %v96, 4294901760
    %v276 = vsub.f32 %v96, %v275
    %277 = vmatpush.msra.mxu0 %v276
    %v278 = vand.u32 %v95, 4294901760
    %v279 = vsub.f32 %v95, %v278
    %280 = vmatpush.msra.mxu0 %v279
    %v281 = vand.u32 %v94, 4294901760
    %v282 = vsub.f32 %v94, %v281
    %283 = vmatpush.msra.mxu0 %v282
    %v284 = vand.u32 %v93, 4294901760
    %v285 = vsub.f32 %v93, %v284
    %286 = vmatpush.msra.mxu0 %v285
    %v287 = vand.u32 %v92, 4294901760
    %v288 = vsub.f32 %v92, %v287
    %289 = vmatpush.msra.mxu0 %v288
    %v290 = vand.u32 %v91, 4294901760
    %v291 = vsub.f32 %v91, %v290
    %292 = vmatpush.msra.mxu0 %v291
    %v293 = vand.u32 %v90, 4294901760
    %v294 = vsub.f32 %v90, %v293
    %295 = vmatpush.msra.mxu0 %v294
    %v296 = vand.u32 %v89, 4294901760
    %v297 = vsub.f32 %v89, %v296
    %298 = vmatpush.msra.mxu0 %v297
    %v299 = vand.u32 %v88, 4294901760
    %v300 = vsub.f32 %v88, %v299
    %301 = vmatmul.f32.gmra.mxu0 %v300
    %v302 = vpop.f32.mrf.mxu0
    %v303 = vadd.f32 %v249, %v302
    %304 = vdwg.mxu0
    %v305 = vand.u32 %v104, 4294901760
    %306 = vmatpush.msra.mxu0 %v305
    %v307 = vand.u32 %v103, 4294901760
    %308 = vmatpush.msra.mxu0 %v307
    %v309 = vand.u32 %v102, 4294901760
    %310 = vmatpush.msra.mxu0 %v309
    %v311 = vand.u32 %v101, 4294901760
    %312 = vmatpush.msra.mxu0 %v311
    %v313 = vand.u32 %v100, 4294901760
    %314 = vmatpush.msra.mxu0 %v313
    %v315 = vand.u32 %v99, 4294901760
    %316 = vmatpush.msra.mxu0 %v315
    %v317 = vand.u32 %v98, 4294901760
    %318 = vmatpush.msra.mxu0 %v317
    %v319 = vand.u32 %v97, 4294901760
    %320 = vmatpush.msra.mxu0 %v319
    %v321 = vand.u32 %v96, 4294901760
    %322 = vmatpush.msra.mxu0 %v321
    %v323 = vand.u32 %v95, 4294901760
    %324 = vmatpush.msra.mxu0 %v323
    %v325 = vand.u32 %v94, 4294901760
    %326 = vmatpush.msra.mxu0 %v325
    %v327 = vand.u32 %v93, 4294901760
    %328 = vmatpush.msra.mxu0 %v327
    %v329 = vand.u32 %v92, 4294901760
    %330 = vmatpush.msra.mxu0 %v329
    %v331 = vand.u32 %v91, 4294901760
    %332 = vmatpush.msra.mxu0 %v331
    %v333 = vand.u32 %v90, 4294901760
    %334 = vmatpush.msra.mxu0 %v333
    %v335 = vand.u32 %v89, 4294901760
    %336 = vmatpush.msra.mxu0 %v335
    %v337 = vand.u32 %v88, 4294901760
    %v338 = vsub.f32 %v88, %v337
    %v339 = vand.u32 %v338, 4294901760
    %340 = vmatmul.f32.gmra.mxu0 %v339
    %v341 = vpop.f32.mrf.mxu0
    %v342 = vadd.f32 %v303, %v341
    %343 = vdwg.mxu0
    %v344 = vand.u32 %v104, 4294901760
    %v345 = vsub.f32 %v104, %v344
    %v346 = vand.u32 %v345, 4294901760
    %347 = vmatpush.msra.mxu0 %v346
    %v348 = vand.u32 %v103, 4294901760
    %v349 = vsub.f32 %v103, %v348
    %v350 = vand.u32 %v349, 4294901760
    %351 = vmatpush.msra.mxu0 %v350
    %v352 = vand.u32 %v102, 4294901760
    %v353 = vsub.f32 %v102, %v352
    %v354 = vand.u32 %v353, 4294901760
    %355 = vmatpush.msra.mxu0 %v354
    %v356 = vand.u32 %v101, 4294901760
    %v357 = vsub.f32 %v101, %v356
    %v358 = vand.u32 %v357, 4294901760
    %359 = vmatpush.msra.mxu0 %v358
    %v360 = vand.u32 %v100, 4294901760
    %v361 = vsub.f32 %v100, %v360
    %v362 = vand.u32 %v361, 4294901760
    %363 = vmatpush.msra.mxu0 %v362
    %v364 = vand.u32 %v99, 4294901760
    %v365 = vsub.f32 %v99, %v364
    %v366 = vand.u32 %v365, 4294901760
    %367 = vmatpush.msra.mxu0 %v366
    %v368 = vand.u32 %v98, 4294901760
    %v369 = vsub.f32 %v98, %v368
    %v370 = vand.u32 %v369, 4294901760
    %371 = vmatpush.msra.mxu0 %v370
    %v372 = vand.u32 %v97, 4294901760
    %v373 = vsub.f32 %v97, %v372
    %v374 = vand.u32 %v373, 4294901760
    %375 = vmatpush.msra.mxu0 %v374
    %v376 = vand.u32 %v96, 4294901760
    %v377 = vsub.f32 %v96, %v376
    %v378 = vand.u32 %v377, 4294901760
    %379 = vmatpush.msra.mxu0 %v378
    %v380 = vand.u32 %v95, 4294901760
    %v381 = vsub.f32 %v95, %v380
    %v382 = vand.u32 %v381, 4294901760
    %383 = vmatpush.msra.mxu0 %v382
    %v384 = vand.u32 %v94, 4294901760
    %v385 = vsub.f32 %v94, %v384
    %v386 = vand.u32 %v385, 4294901760
    %387 = vmatpush.msra.mxu0 %v386
    %v388 = vand.u32 %v93, 4294901760
    %v389 = vsub.f32 %v93, %v388
    %v390 = vand.u32 %v389, 4294901760
    %391 = vmatpush.msra.mxu0 %v390
    %v392 = vand.u32 %v92, 4294901760
    %v393 = vsub.f32 %v92, %v392
    %v394 = vand.u32 %v393, 4294901760
    %395 = vmatpush.msra.mxu0 %v394
    %v396 = vand.u32 %v91, 4294901760
    %v397 = vsub.f32 %v91, %v396
    %v398 = vand.u32 %v397, 4294901760
    %399 = vmatpush.msra.mxu0 %v398
    %v400 = vand.u32 %v90, 4294901760
    %v401 = vsub.f32 %v90, %v400
    %v402 = vand.u32 %v401, 4294901760
    %403 = vmatpush.msra.mxu0 %v402
    %v404 = vand.u32 %v89, 4294901760
    %v405 = vsub.f32 %v89, %v404
    %v406 = vand.u32 %v405, 4294901760
    %407 = vmatpush.msra.mxu0 %v406
    %v408 = vand.u32 %v88, 4294901760
    %409 = vmatmul.f32.gmra.mxu0 %v408
    %v410 = vpop.f32.mrf.mxu0
    %v411 = vadd.f32 %v342, %v410
    %412 = vdwg.mxu0
    %v413 = vand.u32 %v104, 4294901760
    %414 = vmatpush.msra.mxu0 %v413
    %v415 = vand.u32 %v103, 4294901760
    %416 = vmatpush.msra.mxu0 %v415
    %v417 = vand.u32 %v102, 4294901760
    %418 = vmatpush.msra.mxu0 %v417
    %v419 = vand.u32 %v101, 4294901760
    %420 = vmatpush.msra.mxu0 %v419
    %v421 = vand.u32 %v100, 4294901760
    %422 = vmatpush.msra.mxu0 %v421
    %v423 = vand.u32 %v99, 4294901760
    %424 = vmatpush.msra.mxu0 %v423
    %v425 = vand.u32 %v98, 4294901760
    %426 = vmatpush.msra.mxu0 %v425
    %v427 = vand.u32 %v97, 4294901760
    %428 = vmatpush.msra.mxu0 %v427
    %v429 = vand.u32 %v96, 4294901760
    %430 = vmatpush.msra.mxu0 %v429
    %v431 = vand.u32 %v95, 4294901760
    %432 = vmatpush.msra.mxu0 %v431
    %v433 = vand.u32 %v94, 4294901760
    %434 = vmatpush.msra.mxu0 %v433
    %v435 = vand.u32 %v93, 4294901760
    %436 = vmatpush.msra.mxu0 %v435
    %v437 = vand.u32 %v92, 4294901760
    %438 = vmatpush.msra.mxu0 %v437
    %v439 = vand.u32 %v91, 4294901760
    %440 = vmatpush.msra.mxu0 %v439
    %v441 = vand.u32 %v90, 4294901760
    %442 = vmatpush.msra.mxu0 %v441
    %v443 = vand.u32 %v89, 4294901760
    %444 = vmatpush.msra.mxu0 %v443
    %v445 = vand.u32 %v88, 4294901760
    %446 = vmatmul.f32.gmra.mxu0 %v445
    %v447 = vpop.f32.mrf.mxu0
    %v448 = vadd.f32 %v411, %v447
    %449 = vdwg.mxu0
    %v450 = vmax.f32 %v448, 0.0
    %v451 = vld [vmem:[#allocation7] sm:$0xff]
    %v452 = vld [vmem:[#allocation7 + $0x8] sm:$0xff]
    %v453 = vld [vmem:[#allocation7 + $0x10] sm:$0xff]
    %v454 = vld [vmem:[#allocation7 + $0x18] sm:$0xff]
    %v455 = vld [vmem:[#allocation7 + $0x20] sm:$0xff]
    %v456 = vld [vmem:[#allocation7 + $0x28] sm:$0xff]
    %v457 = vld [vmem:[#allocation7 + $0x30] sm:$0xff]
    %v458 = vld [vmem:[#allocation7 + $0x38] sm:$0xff]
    %v459 = vld [vmem:[#allocation7 + $0x40] sm:$0xff]
    %v460 = vld [vmem:[#allocation7 + $0x48] sm:$0xff]
    %v461 = vld [vmem:[#allocation7 + $0x50] sm:$0xff]
    %v462 = vld [vmem:[#allocation7 + $0x58] sm:$0xff]
    %v463 = vld [vmem:[#allocation7 + $0x60] sm:$0xff]
    %v464 = vld [vmem:[#allocation7 + $0x68] sm:$0xff]
    %v465 = vld [vmem:[#allocation7 + $0x70] sm:$0xff]
    %v466 = vld [vmem:[#allocation7 + $0x78] sm:$0xff]
    %v467 = vld [vmem:[%s4] sm:$0x1]
    %v469 = vperm.slane %v467, 0
    %v471 = vand.u32 %v466, 4294901760
    %472 = vmatpush.msra.mxu0 %v471
    %v473 = vand.u32 %v465, 4294901760
    %474 = vmatpush.msra.mxu0 %v473
    %v475 = vand.u32 %v464, 4294901760
    %476 = vmatpush.msra.mxu0 %v475
    %v477 = vand.u32 %v463, 4294901760
    %478 = vmatpush.msra.mxu0 %v477
    %v479 = vand.u32 %v462, 4294901760
    %480 = vmatpush.msra.mxu0 %v479
    %v481 = vand.u32 %v461, 4294901760
    %482 = vmatpush.msra.mxu0 %v481
    %v483 = vand.u32 %v460, 4294901760
    %484 = vmatpush.msra.mxu0 %v483
    %v485 = vand.u32 %v459, 4294901760
    %486 = vmatpush.msra.mxu0 %v485
    %v487 = vand.u32 %v458, 4294901760
    %488 = vmatpush.msra.mxu0 %v487
    %v489 = vand.u32 %v457, 4294901760
    %490 = vmatpush.msra.mxu0 %v489
    %v491 = vand.u32 %v456, 4294901760
    %492 = vmatpush.msra.mxu0 %v491
    %v493 = vand.u32 %v455, 4294901760
    %494 = vmatpush.msra.mxu0 %v493
    %v495 = vand.u32 %v454, 4294901760
    %496 = vmatpush.msra.mxu0 %v495
    %v497 = vand.u32 %v453, 4294901760
    %498 = vmatpush.msra.mxu0 %v497
    %v499 = vand.u32 %v452, 4294901760
    %500 = vmatpush.msra.mxu0 %v499
    %v501 = vand.u32 %v451, 4294901760
    %502 = vmatpush.msra.mxu0 %v501
    %v503 = vand.u32 %v450, 4294901760
    %v504 = vsub.f32 %v450, %v503
    %v505 = vand.u32 %v504, 4294901760
    %v506 = vsub.f32 %v504, %v505
    %v507 = vand.u32 %v506, 4294901760
    %508 = vmatmul.f32.gmra.mxu0 %v507
    %v509 = vpop.f32.mrf.mxu0
    %v510 = vadd.f32 %v469, %v509
    %511 = vdwg.mxu0
    %v512 = vand.u32 %v466, 4294901760
    %v513 = vsub.f32 %v466, %v512
    %v514 = vand.u32 %v513, 4294901760
    %v515 = vsub.f32 %v513, %v514
    %v516 = vand.u32 %v515, 4294901760
    %517 = vmatpush.msra.mxu0 %v516
    %v518 = vand.u32 %v465, 4294901760
    %v519 = vsub.f32 %v465, %v518
    %v520 = vand.u32 %v519, 4294901760
    %v521 = vsub.f32 %v519, %v520
    %v522 = vand.u32 %v521, 4294901760
    %523 = vmatpush.msra.mxu0 %v522
    %v524 = vand.u32 %v464, 4294901760
    %v525 = vsub.f32 %v464, %v524
    %v526 = vand.u32 %v525, 4294901760
    %v527 = vsub.f32 %v525, %v526
    %v528 = vand.u32 %v527, 4294901760
    %529 = vmatpush.msra.mxu0 %v528
    %v530 = vand.u32 %v463, 4294901760
    %v531 = vsub.f32 %v463, %v530
    %v532 = vand.u32 %v531, 4294901760
    %v533 = vsub.f32 %v531, %v532
    %v534 = vand.u32 %v533, 4294901760
    %535 = vmatpush.msra.mxu0 %v534
    %v536 = vand.u32 %v462, 4294901760
    %v537 = vsub.f32 %v462, %v536
    %v538 = vand.u32 %v537, 4294901760
    %v539 = vsub.f32 %v537, %v538
    %v540 = vand.u32 %v539, 4294901760
    %541 = vmatpush.msra.mxu0 %v540
    %v542 = vand.u32 %v461, 4294901760
    %v543 = vsub.f32 %v461, %v542
    %v544 = vand.u32 %v543, 4294901760
    %v545 = vsub.f32 %v543, %v544
    %v546 = vand.u32 %v545, 4294901760
    %547 = vmatpush.msra.mxu0 %v546
    %v548 = vand.u32 %v460, 4294901760
    %v549 = vsub.f32 %v460, %v548
    %v550 = vand.u32 %v549, 4294901760
    %v551 = vsub.f32 %v549, %v550
    %v552 = vand.u32 %v551, 4294901760
    %553 = vmatpush.msra.mxu0 %v552
    %v554 = vand.u32 %v459, 4294901760
    %v555 = vsub.f32 %v459, %v554
    %v556 = vand.u32 %v555, 4294901760
    %v557 = vsub.f32 %v555, %v556
    %v558 = vand.u32 %v557, 4294901760
    %559 = vmatpush.msra.mxu0 %v558
    %v560 = vand.u32 %v458, 4294901760
    %v561 = vsub.f32 %v458, %v560
    %v562 = vand.u32 %v561, 4294901760
    %v563 = vsub.f32 %v561, %v562
    %v564 = vand.u32 %v563, 4294901760
    %565 = vmatpush.msra.mxu0 %v564
    %v566 = vand.u32 %v457, 4294901760
    %v567 = vsub.f32 %v457, %v566
    %v568 = vand.u32 %v567, 4294901760
    %v569 = vsub.f32 %v567, %v568
    %v570 = vand.u32 %v569, 4294901760
    %571 = vmatpush.msra.mxu0 %v570
    %v572 = vand.u32 %v456, 4294901760
    %v573 = vsub.f32 %v456, %v572
    %v574 = vand.u32 %v573, 4294901760
    %v575 = vsub.f32 %v573, %v574
    %v576 = vand.u32 %v575, 4294901760
    %577 = vmatpush.msra.mxu0 %v576
    %v578 = vand.u32 %v455, 4294901760
    %v579 = vsub.f32 %v455, %v578
    %v580 = vand.u32 %v579, 4294901760
    %v581 = vsub.f32 %v579, %v580
    %v582 = vand.u32 %v581, 4294901760
    %583 = vmatpush.msra.mxu0 %v582
    %v584 = vand.u32 %v454, 4294901760
    %v585 = vsub.f32 %v454, %v584
    %v586 = vand.u32 %v585, 4294901760
    %v587 = vsub.f32 %v585, %v586
    %v588 = vand.u32 %v587, 4294901760
    %589 = vmatpush.msra.mxu0 %v588
    %v590 = vand.u32 %v453, 4294901760
    %v591 = vsub.f32 %v453, %v590
    %v592 = vand.u32 %v591, 4294901760
    %v593 = vsub.f32 %v591, %v592
    %v594 = vand.u32 %v593, 4294901760
    %595 = vmatpush.msra.mxu0 %v594
    %v596 = vand.u32 %v452, 4294901760
    %v597 = vsub.f32 %v452, %v596
    %v598 = vand.u32 %v597, 4294901760
    %v599 = vsub.f32 %v597, %v598
    %v600 = vand.u32 %v599, 4294901760
    %601 = vmatpush.msra.mxu0 %v600
    %v602 = vand.u32 %v451, 4294901760
    %v603 = vsub.f32 %v451, %v602
    %v604 = vand.u32 %v603, 4294901760
    %v605 = vsub.f32 %v603, %v604
    %v606 = vand.u32 %v605, 4294901760
    %607 = vmatpush.msra.mxu0 %v606
    %v608 = vand.u32 %v450, 4294901760
    %609 = vmatmul.f32.gmra.mxu0 %v608
    %v610 = vpop.f32.mrf.mxu0
    %v611 = vadd.f32 %v510, %v610
    %612 = vdwg.mxu0
    %v613 = vand.u32 %v466, 4294901760
    %v614 = vsub.f32 %v466, %v613
    %615 = vmatpush.msra.mxu0 %v614
    %v616 = vand.u32 %v465, 4294901760
    %v617 = vsub.f32 %v465, %v616
    %618 = vmatpush.msra.mxu0 %v617
    %v619 = vand.u32 %v464, 4294901760
    %v620 = vsub.f32 %v464, %v619
    %621 = vmatpush.msra.mxu0 %v620
    %v622 = vand.u32 %v463, 4294901760
    %v623 = vsub.f32 %v463, %v622
    %624 = vmatpush.msra.mxu0 %v623
    %v625 = vand.u32 %v462, 4294901760
    %v626 = vsub.f32 %v462, %v625
    %627 = vmatpush.msra.mxu0 %v626
    %v628 = vand.u32 %v461, 4294901760
    %v629 = vsub.f32 %v461, %v628
    %630 = vmatpush.msra.mxu0 %v629
    %v631 = vand.u32 %v460, 4294901760
    %v632 = vsub.f32 %v460, %v631
    %633 = vmatpush.msra.mxu0 %v632
    %v634 = vand.u32 %v459, 4294901760
    %v635 = vsub.f32 %v459, %v634
    %636 = vmatpush.msra.mxu0 %v635
    %v637 = vand.u32 %v458, 4294901760
    %v638 = vsub.f32 %v458, %v637
    %639 = vmatpush.msra.mxu0 %v638
    %v640 = vand.u32 %v457, 4294901760
    %v641 = vsub.f32 %v457, %v640
    %642 = vmatpush.msra.mxu0 %v641
    %v643 = vand.u32 %v456, 4294901760
    %v644 = vsub.f32 %v456, %v643
    %645 = vmatpush.msra.mxu0 %v644
    %v646 = vand.u32 %v455, 4294901760
    %v647 = vsub.f32 %v455, %v646
    %648 = vmatpush.msra.mxu0 %v647
    %v649 = vand.u32 %v454, 4294901760
    %v650 = vsub.f32 %v454, %v649
    %651 = vmatpush.msra.mxu0 %v650
    %v652 = vand.u32 %v453, 4294901760
    %v653 = vsub.f32 %v453, %v652
    %654 = vmatpush.msra.mxu0 %v653
    %v655 = vand.u32 %v452, 4294901760
    %v656 = vsub.f32 %v452, %v655
    %657 = vmatpush.msra.mxu0 %v656
    %v658 = vand.u32 %v451, 4294901760
    %v659 = vsub.f32 %v451, %v658
    %660 = vmatpush.msra.mxu0 %v659
    %v661 = vand.u32 %v450, 4294901760
    %v662 = vsub.f32 %v450, %v661
    %663 = vmatmul.f32.gmra.mxu0 %v662
    %v664 = vpop.f32.mrf.mxu0
    %v665 = vadd.f32 %v611, %v664
    %666 = vdwg.mxu0
    %v667 = vand.u32 %v466, 4294901760
    %668 = vmatpush.msra.mxu0 %v667
    %v669 = vand.u32 %v465, 4294901760
    %670 = vmatpush.msra.mxu0 %v669
    %v671 = vand.u32 %v464, 4294901760
    %672 = vmatpush.msra.mxu0 %v671
    %v673 = vand.u32 %v463, 4294901760
    %674 = vmatpush.msra.mxu0 %v673
    %v675 = vand.u32 %v462, 4294901760
    %676 = vmatpush.msra.mxu0 %v675
    %v677 = vand.u32 %v461, 4294901760
    %678 = vmatpush.msra.mxu0 %v677
    %v679 = vand.u32 %v460, 4294901760
    %680 = vmatpush.msra.mxu0 %v679
    %v681 = vand.u32 %v459, 4294901760
    %682 = vmatpush.msra.mxu0 %v681
    %v683 = vand.u32 %v458, 4294901760
    %684 = vmatpush.msra.mxu0 %v683
    %v685 = vand.u32 %v457, 4294901760
    %686 = vmatpush.msra.mxu0 %v685
    %v687 = vand.u32 %v456, 4294901760
    %688 = vmatpush.msra.mxu0 %v687
    %v689 = vand.u32 %v455, 4294901760
    %690 = vmatpush.msra.mxu0 %v689
    %v691 = vand.u32 %v454, 4294901760
    %692 = vmatpush.msra.mxu0 %v691
    %v693 = vand.u32 %v453, 4294901760
    %694 = vmatpush.msra.mxu0 %v693
    %v695 = vand.u32 %v452, 4294901760
    %696 = vmatpush.msra.mxu0 %v695
    %v697 = vand.u32 %v451, 4294901760
    %698 = vmatpush.msra.mxu0 %v697
    %v699 = vand.u32 %v450, 4294901760
    %v700 = vsub.f32 %v450, %v699
    %v701 = vand.u32 %v700, 4294901760
    %702 = vmatmul.f32.gmra.mxu0 %v701
    %v703 = vpop.f32.mrf.mxu0
    %v704 = vadd.f32 %v665, %v703
    %705 = vdwg.mxu0
    %v706 = vand.u32 %v466, 4294901760
    %v707 = vsub.f32 %v466, %v706
    %v708 = vand.u32 %v707, 4294901760
    %709 = vmatpush.msra.mxu0 %v708
    %v710 = vand.u32 %v465, 4294901760
    %v711 = vsub.f32 %v465, %v710
    %v712 = vand.u32 %v711, 4294901760
    %713 = vmatpush.msra.mxu0 %v712
    %v714 = vand.u32 %v464, 4294901760
    %v715 = vsub.f32 %v464, %v714
    %v716 = vand.u32 %v715, 4294901760
    %717 = vmatpush.msra.mxu0 %v716
    %v718 = vand.u32 %v463, 4294901760
    %v719 = vsub.f32 %v463, %v718
    %v720 = vand.u32 %v719, 4294901760
    %721 = vmatpush.msra.mxu0 %v720
    %v722 = vand.u32 %v462, 4294901760
    %v723 = vsub.f32 %v462, %v722
    %v724 = vand.u32 %v723, 4294901760
    %725 = vmatpush.msra.mxu0 %v724
    %v726 = vand.u32 %v461, 4294901760
    %v727 = vsub.f32 %v461, %v726
    %v728 = vand.u32 %v727, 4294901760
    %729 = vmatpush.msra.mxu0 %v728
    %v730 = vand.u32 %v460, 4294901760
    %v731 = vsub.f32 %v460, %v730
    %v732 = vand.u32 %v731, 4294901760
    %733 = vmatpush.msra.mxu0 %v732
    %v734 = vand.u32 %v459, 4294901760
    %v735 = vsub.f32 %v459, %v734
    %v736 = vand.u32 %v735, 4294901760
    %737 = vmatpush.msra.mxu0 %v736
    %v738 = vand.u32 %v458, 4294901760
    %v739 = vsub.f32 %v458, %v738
    %v740 = vand.u32 %v739, 4294901760
    %741 = vmatpush.msra.mxu0 %v740
    %v742 = vand.u32 %v457, 4294901760
    %v743 = vsub.f32 %v457, %v742
    %v744 = vand.u32 %v743, 4294901760
    %745 = vmatpush.msra.mxu0 %v744
    %v746 = vand.u32 %v456, 4294901760
    %v747 = vsub.f32 %v456, %v746
    %v748 = vand.u32 %v747, 4294901760
    %749 = vmatpush.msra.mxu0 %v748
    %v750 = vand.u32 %v455, 4294901760
    %v751 = vsub.f32 %v455, %v750
    %v752 = vand.u32 %v751, 4294901760
    %753 = vmatpush.msra.mxu0 %v752
    %v754 = vand.u32 %v454, 4294901760
    %v755 = vsub.f32 %v454, %v754
    %v756 = vand.u32 %v755, 4294901760
    %757 = vmatpush.msra.mxu0 %v756
    %v758 = vand.u32 %v453, 4294901760
    %v759 = vsub.f32 %v453, %v758
    %v760 = vand.u32 %v759, 4294901760
    %761 = vmatpush.msra.mxu0 %v760
    %v762 = vand.u32 %v452, 4294901760
    %v763 = vsub.f32 %v452, %v762
    %v764 = vand.u32 %v763, 4294901760
    %765 = vmatpush.msra.mxu0 %v764
    %v766 = vand.u32 %v451, 4294901760
    %v767 = vsub.f32 %v451, %v766
    %v768 = vand.u32 %v767, 4294901760
    %769 = vmatpush.msra.mxu0 %v768
    %v770 = vand.u32 %v450, 4294901760
    %771 = vmatmul.f32.gmra.mxu0 %v770
    %v772 = vpop.f32.mrf.mxu0
    %v773 = vadd.f32 %v704, %v772
    %774 = vdwg.mxu0
    %v775 = vand.u32 %v466, 4294901760
    %776 = vmatpush.msra.mxu0 %v775
    %v777 = vand.u32 %v465, 4294901760
    %778 = vmatpush.msra.mxu0 %v777
    %v779 = vand.u32 %v464, 4294901760
    %780 = vmatpush.msra.mxu0 %v779
    %v781 = vand.u32 %v463, 4294901760
    %782 = vmatpush.msra.mxu0 %v781
    %v783 = vand.u32 %v462, 4294901760
    %784 = vmatpush.msra.mxu0 %v783
    %v785 = vand.u32 %v461, 4294901760
    %786 = vmatpush.msra.mxu0 %v785
    %v787 = vand.u32 %v460, 4294901760
    %788 = vmatpush.msra.mxu0 %v787
    %v789 = vand.u32 %v459, 4294901760
    %790 = vmatpush.msra.mxu0 %v789
    %v791 = vand.u32 %v458, 4294901760
    %792 = vmatpush.msra.mxu0 %v791
    %v793 = vand.u32 %v457, 4294901760
    %794 = vmatpush.msra.mxu0 %v793
    %v795 = vand.u32 %v456, 4294901760
    %796 = vmatpush.msra.mxu0 %v795
    %v797 = vand.u32 %v455, 4294901760
    %798 = vmatpush.msra.mxu0 %v797
    %v799 = vand.u32 %v454, 4294901760
    %800 = vmatpush.msra.mxu0 %v799
    %v801 = vand.u32 %v453, 4294901760
    %802 = vmatpush.msra.mxu0 %v801
    %v803 = vand.u32 %v452, 4294901760
    %804 = vmatpush.msra.mxu0 %v803
    %v805 = vand.u32 %v451, 4294901760
    %806 = vmatpush.msra.mxu0 %v805
    %v807 = vand.u32 %v450, 4294901760
    %808 = vmatmul.f32.gmra.mxu0 %v807
    %v809 = vpop.f32.mrf.mxu0
    %v810 = vadd.f32 %v773, %v809
    %811 = vdwg.mxu0
    %v812 = vmax.f32 %v810, 0.0
    %v813 = vld [vmem:[#allocation8] sm:$0xff]
    %v814 = vld [vmem:[#allocation8 + $0x8] sm:$0xff]
    %v815 = vld [vmem:[#allocation8 + $0x10] sm:$0xff]
    %v816 = vld [vmem:[#allocation8 + $0x18] sm:$0xff]
    %v817 = vld [vmem:[#allocation8 + $0x20] sm:$0xff]
    %v818 = vld [vmem:[#allocation8 + $0x28] sm:$0xff]
    %v819 = vld [vmem:[#allocation8 + $0x30] sm:$0xff]
    %v820 = vld [vmem:[#allocation8 + $0x38] sm:$0xff]
    %v821 = vld [vmem:[#allocation8 + $0x40] sm:$0xff]
    %v822 = vld [vmem:[#allocation8 + $0x48] sm:$0xff]
    %v823 = vld [vmem:[#allocation8 + $0x50] sm:$0xff]
    %v824 = vld [vmem:[#allocation8 + $0x58] sm:$0xff]
    %v825 = vld [vmem:[#allocation8 + $0x60] sm:$0xff]
    %v826 = vld [vmem:[#allocation8 + $0x68] sm:$0xff]
    %v827 = vld [vmem:[#allocation8 + $0x70] sm:$0xff]
    %v828 = vld [vmem:[#allocation8 + $0x78] sm:$0xff]
    %v829 = vld [vmem:[%s6] sm:$0x1]
    %v831 = vperm.slane %v829, 0
    %v833 = vand.u32 %v828, 4294901760
    %834 = vmatpush.msra.mxu0 %v833
    %v835 = vand.u32 %v827, 4294901760
    %836 = vmatpush.msra.mxu0 %v835
    %v837 = vand.u32 %v826, 4294901760
    %838 = vmatpush.msra.mxu0 %v837
    %v839 = vand.u32 %v825, 4294901760
    %840 = vmatpush.msra.mxu0 %v839
    %v841 = vand.u32 %v824, 4294901760
    %842 = vmatpush.msra.mxu0 %v841
    %v843 = vand.u32 %v823, 4294901760
    %844 = vmatpush.msra.mxu0 %v843
    %v845 = vand.u32 %v822, 4294901760
    %846 = vmatpush.msra.mxu0 %v845
    %v847 = vand.u32 %v821, 4294901760
    %848 = vmatpush.msra.mxu0 %v847
    %v849 = vand.u32 %v820, 4294901760
    %850 = vmatpush.msra.mxu0 %v849
    %v851 = vand.u32 %v819, 4294901760
    %852 = vmatpush.msra.mxu0 %v851
    %v853 = vand.u32 %v818, 4294901760
    %854 = vmatpush.msra.mxu0 %v853
    %v855 = vand.u32 %v817, 4294901760
    %856 = vmatpush.msra.mxu0 %v855
    %v857 = vand.u32 %v816, 4294901760
    %858 = vmatpush.msra.mxu0 %v857
    %v859 = vand.u32 %v815, 4294901760
    %860 = vmatpush.msra.mxu0 %v859
    %v861 = vand.u32 %v814, 4294901760
    %862 = vmatpush.msra.mxu0 %v861
    %v863 = vand.u32 %v813, 4294901760
    %864 = vmatpush.msra.mxu0 %v863
    %v865 = vand.u32 %v812, 4294901760
    %v866 = vsub.f32 %v812, %v865
    %v867 = vand.u32 %v866, 4294901760
    %v868 = vsub.f32 %v866, %v867
    %v869 = vand.u32 %v868, 4294901760
    %870 = vmatmul.f32.gmra.mxu0 %v869
    %v871 = vpop.f32.mrf.mxu0
    %v872 = vadd.f32 %v831, %v871
    %873 = vdwg.mxu0
    %v874 = vand.u32 %v828, 4294901760
    %v875 = vsub.f32 %v828, %v874
    %v876 = vand.u32 %v875, 4294901760
    %v877 = vsub.f32 %v875, %v876
    %v878 = vand.u32 %v877, 4294901760
    %879 = vmatpush.msra.mxu0 %v878
    %v880 = vand.u32 %v827, 4294901760
    %v881 = vsub.f32 %v827, %v880
    %v882 = vand.u32 %v881, 4294901760
    %v883 = vsub.f32 %v881, %v882
    %v884 = vand.u32 %v883, 4294901760
    %885 = vmatpush.msra.mxu0 %v884
    %v886 = vand.u32 %v826, 4294901760
    %v887 = vsub.f32 %v826, %v886
    %v888 = vand.u32 %v887, 4294901760
    %v889 = vsub.f32 %v887, %v888
    %v890 = vand.u32 %v889, 4294901760
    %891 = vmatpush.msra.mxu0 %v890
    %v892 = vand.u32 %v825, 4294901760
    %v893 = vsub.f32 %v825, %v892
    %v894 = vand.u32 %v893, 4294901760
    %v895 = vsub.f32 %v893, %v894
    %v896 = vand.u32 %v895, 4294901760
    %897 = vmatpush.msra.mxu0 %v896
    %v898 = vand.u32 %v824, 4294901760
    %v899 = vsub.f32 %v824, %v898
    %v900 = vand.u32 %v899, 4294901760
    %v901 = vsub.f32 %v899, %v900
    %v902 = vand.u32 %v901, 4294901760
    %903 = vmatpush.msra.mxu0 %v902
    %v904 = vand.u32 %v823, 4294901760
    %v905 = vsub.f32 %v823, %v904
    %v906 = vand.u32 %v905, 4294901760
    %v907 = vsub.f32 %v905, %v906
    %v908 = vand.u32 %v907, 4294901760
    %909 = vmatpush.msra.mxu0 %v908
    %v910 = vand.u32 %v822, 4294901760
    %v911 = vsub.f32 %v822, %v910
    %v912 = vand.u32 %v911, 4294901760
    %v913 = vsub.f32 %v911, %v912
    %v914 = vand.u32 %v913, 4294901760
    %915 = vmatpush.msra.mxu0 %v914
    %v916 = vand.u32 %v821, 4294901760
    %v917 = vsub.f32 %v821, %v916
    %v918 = vand.u32 %v917, 4294901760
    %v919 = vsub.f32 %v917, %v918
    %v920 = vand.u32 %v919, 4294901760
    %921 = vmatpush.msra.mxu0 %v920
    %v922 = vand.u32 %v820, 4294901760
    %v923 = vsub.f32 %v820, %v922
    %v924 = vand.u32 %v923, 4294901760
    %v925 = vsub.f32 %v923, %v924
    %v926 = vand.u32 %v925, 4294901760
    %927 = vmatpush.msra.mxu0 %v926
    %v928 = vand.u32 %v819, 4294901760
    %v929 = vsub.f32 %v819, %v928
    %v930 = vand.u32 %v929, 4294901760
    %v931 = vsub.f32 %v929, %v930
    %v932 = vand.u32 %v931, 4294901760
    %933 = vmatpush.msra.mxu0 %v932
    %v934 = vand.u32 %v818, 4294901760
    %v935 = vsub.f32 %v818, %v934
    %v936 = vand.u32 %v935, 4294901760
    %v937 = vsub.f32 %v935, %v936
    %v938 = vand.u32 %v937, 4294901760
    %939 = vmatpush.msra.mxu0 %v938
    %v940 = vand.u32 %v817, 4294901760
    %v941 = vsub.f32 %v817, %v940
    %v942 = vand.u32 %v941, 4294901760
    %v943 = vsub.f32 %v941, %v942
    %v944 = vand.u32 %v943, 4294901760
    %945 = vmatpush.msra.mxu0 %v944
    %v946 = vand.u32 %v816, 4294901760
    %v947 = vsub.f32 %v816, %v946
    %v948 = vand.u32 %v947, 4294901760
    %v949 = vsub.f32 %v947, %v948
    %v950 = vand.u32 %v949, 4294901760
    %951 = vmatpush.msra.mxu0 %v950
    %v952 = vand.u32 %v815, 4294901760
    %v953 = vsub.f32 %v815, %v952
    %v954 = vand.u32 %v953, 4294901760
    %v955 = vsub.f32 %v953, %v954
    %v956 = vand.u32 %v955, 4294901760
    %957 = vmatpush.msra.mxu0 %v956
    %v958 = vand.u32 %v814, 4294901760
    %v959 = vsub.f32 %v814, %v958
    %v960 = vand.u32 %v959, 4294901760
    %v961 = vsub.f32 %v959, %v960
    %v962 = vand.u32 %v961, 4294901760
    %963 = vmatpush.msra.mxu0 %v962
    %v964 = vand.u32 %v813, 4294901760
    %v965 = vsub.f32 %v813, %v964
    %v966 = vand.u32 %v965, 4294901760
    %v967 = vsub.f32 %v965, %v966
    %v968 = vand.u32 %v967, 4294901760
    %969 = vmatpush.msra.mxu0 %v968
    %v970 = vand.u32 %v812, 4294901760
    %971 = vmatmul.f32.gmra.mxu0 %v970
    %v972 = vpop.f32.mrf.mxu0
    %v973 = vadd.f32 %v872, %v972
    %974 = vdwg.mxu0
    %v975 = vand.u32 %v828, 4294901760
    %v976 = vsub.f32 %v828, %v975
    %977 = vmatpush.msra.mxu0 %v976
    %v978 = vand.u32 %v827, 4294901760
    %v979 = vsub.f32 %v827, %v978
    %980 = vmatpush.msra.mxu0 %v979
    %v981 = vand.u32 %v826, 4294901760
    %v982 = vsub.f32 %v826, %v981
    %983 = vmatpush.msra.mxu0 %v982
    %v984 = vand.u32 %v825, 4294901760
    %v985 = vsub.f32 %v825, %v984
    %986 = vmatpush.msra.mxu0 %v985
    %v987 = vand.u32 %v824, 4294901760
    %v988 = vsub.f32 %v824, %v987
    %989 = vmatpush.msra.mxu0 %v988
    %v990 = vand.u32 %v823, 4294901760
    %v991 = vsub.f32 %v823, %v990
    %992 = vmatpush.msra.mxu0 %v991
    %v993 = vand.u32 %v822, 4294901760
    %v994 = vsub.f32 %v822, %v993
    %995 = vmatpush.msra.mxu0 %v994
    %v996 = vand.u32 %v821, 4294901760
    %v997 = vsub.f32 %v821, %v996
    %998 = vmatpush.msra.mxu0 %v997
    %v999 = vand.u32 %v820, 4294901760
    %v1000 = vsub.f32 %v820, %v999
    %1001 = vmatpush.msra.mxu0 %v1000
    %v1002 = vand.u32 %v819, 4294901760
    %v1003 = vsub.f32 %v819, %v1002
    %1004 = vmatpush.msra.mxu0 %v1003
    %v1005 = vand.u32 %v818, 4294901760
    %v1006 = vsub.f32 %v818, %v1005
    %1007 = vmatpush.msra.mxu0 %v1006
    %v1008 = vand.u32 %v817, 4294901760
    %v1009 = vsub.f32 %v817, %v1008
    %1010 = vmatpush.msra.mxu0 %v1009
    %v1011 = vand.u32 %v816, 4294901760
    %v1012 = vsub.f32 %v816, %v1011
    %1013 = vmatpush.msra.mxu0 %v1012
    %v1014 = vand.u32 %v815, 4294901760
    %v1015 = vsub.f32 %v815, %v1014
    %1016 = vmatpush.msra.mxu0 %v1015
    %v1017 = vand.u32 %v814, 4294901760
    %v1018 = vsub.f32 %v814, %v1017
    %1019 = vmatpush.msra.mxu0 %v1018
    %v1020 = vand.u32 %v813, 4294901760
    %v1021 = vsub.f32 %v813, %v1020
    %1022 = vmatpush.msra.mxu0 %v1021
    %v1023 = vand.u32 %v812, 4294901760
    %v1024 = vsub.f32 %v812, %v1023
    %1025 = vmatmul.f32.gmra.mxu0 %v1024
    %v1026 = vpop.f32.mrf.mxu0
    %v1027 = vadd.f32 %v973, %v1026
    %1028 = vdwg.mxu0
    %v1029 = vand.u32 %v828, 4294901760
    %1030 = vmatpush.msra.mxu0 %v1029
    %v1031 = vand.u32 %v827, 4294901760
    %1032 = vmatpush.msra.mxu0 %v1031
    %v1033 = vand.u32 %v826, 4294901760
    %1034 = vmatpush.msra.mxu0 %v1033
    %v1035 = vand.u32 %v825, 4294901760
    %1036 = vmatpush.msra.mxu0 %v1035
    %v1037 = vand.u32 %v824, 4294901760
    %1038 = vmatpush.msra.mxu0 %v1037
    %v1039 = vand.u32 %v823, 4294901760
    %1040 = vmatpush.msra.mxu0 %v1039
    %v1041 = vand.u32 %v822, 4294901760
    %1042 = vmatpush.msra.mxu0 %v1041
    %v1043 = vand.u32 %v821, 4294901760
    %1044 = vmatpush.msra.mxu0 %v1043
    %v1045 = vand.u32 %v820, 4294901760
    %1046 = vmatpush.msra.mxu0 %v1045
    %v1047 = vand.u32 %v819, 4294901760
    %1048 = vmatpush.msra.mxu0 %v1047
    %v1049 = vand.u32 %v818, 4294901760
    %1050 = vmatpush.msra.mxu0 %v1049
    %v1051 = vand.u32 %v817, 4294901760
    %1052 = vmatpush.msra.mxu0 %v1051
    %v1053 = vand.u32 %v816, 4294901760
    %1054 = vmatpush.msra.mxu0 %v1053
    %v1055 = vand.u32 %v815, 4294901760
    %1056 = vmatpush.msra.mxu0 %v1055
    %v1057 = vand.u32 %v814, 4294901760
    %1058 = vmatpush.msra.mxu0 %v1057
    %v1059 = vand.u32 %v813, 4294901760
    %1060 = vmatpush.msra.mxu0 %v1059
    %v1061 = vand.u32 %v812, 4294901760
    %v1062 = vsub.f32 %v812, %v1061
    %v1063 = vand.u32 %v1062, 4294901760
    %1064 = vmatmul.f32.gmra.mxu0 %v1063
    %v1065 = vpop.f32.mrf.mxu0
    %v1066 = vadd.f32 %v1027, %v1065
    %1067 = vdwg.mxu0
    %v1068 = vand.u32 %v828, 4294901760
    %v1069 = vsub.f32 %v828, %v1068
    %v1070 = vand.u32 %v1069, 4294901760
    %1071 = vmatpush.msra.mxu0 %v1070
    %v1072 = vand.u32 %v827, 4294901760
    %v1073 = vsub.f32 %v827, %v1072
    %v1074 = vand.u32 %v1073, 4294901760
    %1075 = vmatpush.msra.mxu0 %v1074
    %v1076 = vand.u32 %v826, 4294901760
    %v1077 = vsub.f32 %v826, %v1076
    %v1078 = vand.u32 %v1077, 4294901760
    %1079 = vmatpush.msra.mxu0 %v1078
    %v1080 = vand.u32 %v825, 4294901760
    %v1081 = vsub.f32 %v825, %v1080
    %v1082 = vand.u32 %v1081, 4294901760
    %1083 = vmatpush.msra.mxu0 %v1082
    %v1084 = vand.u32 %v824, 4294901760
    %v1085 = vsub.f32 %v824, %v1084
    %v1086 = vand.u32 %v1085, 4294901760
    %1087 = vmatpush.msra.mxu0 %v1086
    %v1088 = vand.u32 %v823, 4294901760
    %v1089 = vsub.f32 %v823, %v1088
    %v1090 = vand.u32 %v1089, 4294901760
    %1091 = vmatpush.msra.mxu0 %v1090
    %v1092 = vand.u32 %v822, 4294901760
    %v1093 = vsub.f32 %v822, %v1092
    %v1094 = vand.u32 %v1093, 4294901760
    %1095 = vmatpush.msra.mxu0 %v1094
    %v1096 = vand.u32 %v821, 4294901760
    %v1097 = vsub.f32 %v821, %v1096
    %v1098 = vand.u32 %v1097, 4294901760
    %1099 = vmatpush.msra.mxu0 %v1098
    %v1100 = vand.u32 %v820, 4294901760
    %v1101 = vsub.f32 %v820, %v1100
    %v1102 = vand.u32 %v1101, 4294901760
    %1103 = vmatpush.msra.mxu0 %v1102
    %v1104 = vand.u32 %v819, 4294901760
    %v1105 = vsub.f32 %v819, %v1104
    %v1106 = vand.u32 %v1105, 4294901760
    %1107 = vmatpush.msra.mxu0 %v1106
    %v1108 = vand.u32 %v818, 4294901760
    %v1109 = vsub.f32 %v818, %v1108
    %v1110 = vand.u32 %v1109, 4294901760
    %1111 = vmatpush.msra.mxu0 %v1110
    %v1112 = vand.u32 %v817, 4294901760
    %v1113 = vsub.f32 %v817, %v1112
    %v1114 = vand.u32 %v1113, 4294901760
    %1115 = vmatpush.msra.mxu0 %v1114
    %v1116 = vand.u32 %v816, 4294901760
    %v1117 = vsub.f32 %v816, %v1116
    %v1118 = vand.u32 %v1117, 4294901760
    %1119 = vmatpush.msra.mxu0 %v1118
    %v1120 = vand.u32 %v815, 4294901760
    %v1121 = vsub.f32 %v815, %v1120
    %v1122 = vand.u32 %v1121, 4294901760
    %1123 = vmatpush.msra.mxu0 %v1122
    %v1124 = vand.u32 %v814, 4294901760
    %v1125 = vsub.f32 %v814, %v1124
    %v1126 = vand.u32 %v1125, 4294901760
    %1127 = vmatpush.msra.mxu0 %v1126
    %v1128 = vand.u32 %v813, 4294901760
    %v1129 = vsub.f32 %v813, %v1128
    %v1130 = vand.u32 %v1129, 4294901760
    %1131 = vmatpush.msra.mxu0 %v1130
    %v1132 = vand.u32 %v812, 4294901760
    %1133 = vmatmul.f32.gmra.mxu0 %v1132
    %v1134 = vpop.f32.mrf.mxu0
    %v1135 = vadd.f32 %v1066, %v1134
    %1136 = vdwg.mxu0
    %v1137 = vand.u32 %v828, 4294901760
    %1138 = vmatpush.msra.mxu0 %v1137
    %v1139 = vand.u32 %v827, 4294901760
    %1140 = vmatpush.msra.mxu0 %v1139
    %v1141 = vand.u32 %v826, 4294901760
    %1142 = vmatpush.msra.mxu0 %v1141
    %v1143 = vand.u32 %v825, 4294901760
    %1144 = vmatpush.msra.mxu0 %v1143
    %v1145 = vand.u32 %v824, 4294901760
    %1146 = vmatpush.msra.mxu0 %v1145
    %v1147 = vand.u32 %v823, 4294901760
    %1148 = vmatpush.msra.mxu0 %v1147
    %v1149 = vand.u32 %v822, 4294901760
    %1150 = vmatpush.msra.mxu0 %v1149
    %v1151 = vand.u32 %v821, 4294901760
    %1152 = vmatpush.msra.mxu0 %v1151
    %v1153 = vand.u32 %v820, 4294901760
    %1154 = vmatpush.msra.mxu0 %v1153
    %v1155 = vand.u32 %v819, 4294901760
    %1156 = vmatpush.msra.mxu0 %v1155
    %v1157 = vand.u32 %v818, 4294901760
    %1158 = vmatpush.msra.mxu0 %v1157
    %v1159 = vand.u32 %v817, 4294901760
    %1160 = vmatpush.msra.mxu0 %v1159
    %v1161 = vand.u32 %v816, 4294901760
    %1162 = vmatpush.msra.mxu0 %v1161
    %v1163 = vand.u32 %v815, 4294901760
    %1164 = vmatpush.msra.mxu0 %v1163
    %v1165 = vand.u32 %v814, 4294901760
    %1166 = vmatpush.msra.mxu0 %v1165
    %v1167 = vand.u32 %v813, 4294901760
    %1168 = vmatpush.msra.mxu0 %v1167
    %v1169 = vand.u32 %v812, 4294901760
    %1170 = vmatmul.f32.gmra.mxu0 %v1169
    %v1171 = vpop.f32.mrf.mxu0
    %v1172 = vadd.f32 %v1135, %v1171
    %1173 = vdwg.mxu0
    %v1174 = vtanh.pop %v1172
    %1175 = vst [vmem:[#allocation10] sm:$0xff] %v1174
    // Predicated region
    $region46: #{tpu_custom_call.1} parent=1 // pred_check
      _
    $region47: #{tpu_custom_call.1} parent=1 // pred_check_branch
      %1177 = sbr.rel (0) target = $region49
    $region48: #{tpu_custom_call.1} parent=1 // pred_region
      %1179 = vsyncadd [#allocation4], 0
      %s1181 = sshll.u32 [#allocation10], 4
      %s1182 = int_to_ptr.vmem [resolvable:$true] %s1181
      %s1183 = sshll.u32 %s7, 4
      %s1184 = int_to_ptr.hbm [resolvable:$true] %s1183
      %1186 = dma.vmem_to_hbm [thread:$0]  %s1182, 128, %s1184, [#allocation4]
    $region49: #{tpu_custom_call.1} parent=1 // pred_fallthru
      _
    // Predicated region
    $region50: #{tpu_custom_call.1} parent=1 // pred_check
      _
    $region51: #{tpu_custom_call.1} parent=1 // pred_check_branch
      %1188 = sbr.rel (0) target = $region53
    $region52: #{tpu_custom_call.1} parent=1 // pred_region
      %1190 = dma.done [#allocation4], 128
    $region53: #{tpu_custom_call.1} parent=1 // pred_fallthru
      _
    %1191 = vsyncpa [#allocation3], 1
    %1192 = vsyncpa [#allocation6], 1
    %1193 = vsyncpa [#allocation9], 1
    %1194 = vsyncpa [#allocation4], 1

</llo_original>
